<compile_context>
chip_gen: v6e
topology: v6e:2x2x1
jax: 0.10.0
libtpu: 0.0.40
codegen_flags: <defaults>
</compile_context>

<pallas_src>
import jax
import jax.numpy as jnp
from jax import lax
from jax.experimental import pallas as pl
from jax.experimental.pallas import tpu as pltpu

NEG_SLOPE = 0.2  # LeakyReLU(0.2)


def _downsample_kernel(xps_ref, w1_ref, b1_ref, w2_ref, b2_ref, o_ref, h1p_ref):
    # xps_ref: (4, Cin, Hp2, Wp2) bf16  phase-decomposed zero-padded input, phase=(r%2)*2+c%2
    # w1_ref : (Cout, 9*Cin)      bf16  conv1 slab, column = (kh*3+kw)*Cin + cin
    # b1_ref : (Cout, 1)          f32
    # w2_ref : (Cout, 9*Cout)     bf16  conv2 slab, column = (kh*3+kw)*Cout + c_mid
    # b2_ref : (Cout, 1)          f32
    # o_ref  : (Cout, Ho*Wo)      f32   lane-dense output (flattened spatial on lanes)
    # h1p_ref: (Cout, Ho+2, Wo+2) bf16  scratch: zero-bordered conv1 activation
    Cout = o_ref.shape[0]
    Cin = xps_ref.shape[1]
    Ho = h1p_ref.shape[1] - 2
    Wo = h1p_ref.shape[2] - 2

    # ---- conv1: im2col concat + single (Cout, 9*Cin) @ (9*Cin, Ho*Wo) MXU matmul --------
    taps1 = []
    for kh in range(3):
        for kw in range(3):
            phase = (kh % 2) * 2 + (kw % 2)
            ih, iw = kh // 2, kw // 2
            taps1.append(xps_ref[phase, :, ih:ih + Ho, iw:iw + Wo])    # (Cin, Ho, Wo) bf16
    a1 = jnp.concatenate(taps1, axis=0).reshape(9 * Cin, Ho * Wo)      # one reshape
    acc1 = jnp.dot(w1_ref[...], a1, preferred_element_type=jnp.float32)
    acc1 = acc1 + b1_ref[...]                                          # f32 bias
    h1 = jnp.maximum(acc1, NEG_SLOPE * acc1)                           # LeakyReLU(0.2), f32

    # Refresh only the 1-element zero border (interior is fully overwritten every step).
    zrow = jnp.zeros((Cout, 1, Wo + 2), dtype=h1p_ref.dtype)
    zcol = jnp.zeros((Cout, Ho, 1), dtype=h1p_ref.dtype)
    h1p_ref[:, 0:1, :] = zrow
    h1p_ref[:, Ho + 1:Ho + 2, :] = zrow
    h1p_ref[:, 1:1 + Ho, 0:1] = zcol
    h1p_ref[:, 1:1 + Ho, Wo + 1:Wo + 2] = zcol
    h1p_ref[:, 1:1 + Ho, 1:1 + Wo] = h1.astype(h1p_ref.dtype).reshape(Cout, Ho, Wo)

    # ---- conv2: im2col concat + single (Cout, 9*Cout) @ (9*Cout, Ho*Wo) MXU matmul ------
    taps2 = []
    for kh in range(3):
        for kw in range(3):
            taps2.append(h1p_ref[:, kh:kh + Ho, kw:kw + Wo])           # (Cout, Ho, Wo) bf16
    a2 = jnp.concatenate(taps2, axis=0).reshape(9 * Cout, Ho * Wo)
    acc2 = jnp.dot(w2_ref[...], a2, preferred_element_type=jnp.float32)
    acc2 = acc2 + b2_ref[...]
    o_ref[...] = jnp.maximum(acc2, NEG_SLOPE * acc2).astype(o_ref.dtype)


def downsample(x_nchw, w1, b1, w2, b2):
    """x_nchw: (N, Cin, H, W) f32.  Weights in PyTorch layout:
       w1 (Cout, Cin, 3, 3), b1 (Cout,), w2 (Cout, Cout, 3, 3), b2 (Cout,)."""
    N, Cin, H, W = x_nchw.shape
    Cout = w1.shape[0]
    Ho = (H + 1) // 2
    Wo = (W + 1) // 2

    # Zero-pad by 1 (conv padding) plus extra bottom/right so the padded extent is even for
    # the 2x2 space-to-depth decomposition (the extra zeros are never read by the kernel).
    Hp = H + 2 + ((H + 2) % 2)
    Wp = W + 2 + ((W + 2) % 2)
    Hp2, Wp2 = Hp // 2, Wp // 2
    xp = jnp.pad(x_nchw, ((0, 0), (0, 0), (1, Hp - H - 1), (1, Wp - W - 1)))
    # (N, Cin, Hp, Wp) -> (N, 4, Cin, Hp2, Wp2), phase = (row%2)*2 + (col%2); cast to bf16
    # so both matmul operands take the bf16 MXU path (accumulation stays f32 in-kernel).
    xps = xp.reshape(N, Cin, Hp2, 2, Wp2, 2).transpose(0, 3, 5, 1, 2, 4)
    xps = xps.reshape(N, 4, Cin, Hp2, Wp2).astype(jnp.bfloat16)

    # PyTorch OIHW -> dense 2-D bf16 slabs whose column order matches the in-kernel im2col
    # row order ((kh*3+kw)*C + c); biases as f32 (Cout, 1) for lane-broadcast adds.
    w1_k = jnp.transpose(w1, (0, 2, 3, 1)).reshape(Cout, 9 * Cin).astype(jnp.bfloat16)
    w2_k = jnp.transpose(w2, (0, 2, 3, 1)).reshape(Cout, 9 * Cout).astype(jnp.bfloat16)
    b1_k = b1.reshape(Cout, 1).astype(jnp.float32)
    b2_k = b2.reshape(Cout, 1).astype(jnp.float32)

    # ---- VMEM budget (per grid step; in/out/weights assumed double-buffered) ------------
    BF16, F32 = 2, 4
    in_blk = 4 * Cin * Hp2 * Wp2 * BF16
    out_blk = Cout * Ho * Wo * F32
    w_blk = (9 * Cin * Cout + 9 * Cout * Cout) * BF16 + 2 * Cout * F32
    scratch = Cout * (Ho + 2) * (Wo + 2) * BF16
    live_vals = (9 * Cin * Ho * Wo * BF16          # conv1 im2col value
                 + 9 * Cout * Ho * Wo * BF16       # conv2 im2col value
                 + 3 * Cout * Ho * Wo * F32)       # f32 accumulators / activation
    vmem_needed = 2 * (in_blk + out_blk + w_blk) + scratch + live_vals
    vmem_needed += vmem_needed // 4 + (1 << 20)    # Mosaic internal scratch / relayout headroom
    assert vmem_needed < 40 * 1024 * 1024, (
        "per-sample block exceeds the v7x-safe VMEM budget; "
        "add an Ho-band grid axis (1-row halo) before scaling H/W up")
    vmem_limit = int(min(48 * 1024 * 1024, max(2 * vmem_needed, 16 * 1024 * 1024)))

    flops = 2 * N * Ho * Wo * 9 * (Cin * Cout + Cout * Cout)
    bytes_accessed = N * (in_blk + out_blk) + w_blk

    out = pl.pallas_call(
        _downsample_kernel,
        out_shape=jax.ShapeDtypeStruct((N, Cout, Ho * Wo), x_nchw.dtype),
        grid_spec=pltpu.PrefetchScalarGridSpec(
            num_scalar_prefetch=0,
            grid=(N,),
            in_specs=[
                pl.BlockSpec((pl.Squeezed(), 4, Cin, Hp2, Wp2),
                             lambda n: (n, 0, 0, 0, 0)),
                pl.BlockSpec((Cout, 9 * Cin), lambda n: (0, 0)),
                pl.BlockSpec((Cout, 1), lambda n: (0, 0)),
                pl.BlockSpec((Cout, 9 * Cout), lambda n: (0, 0)),
                pl.BlockSpec((Cout, 1), lambda n: (0, 0)),
            ],
            out_specs=pl.BlockSpec((pl.Squeezed(), Cout, Ho * Wo),
                                   lambda n: (n, 0, 0)),
            scratch_shapes=[pltpu.VMEM((Cout, Ho + 2, Wo + 2), jnp.bfloat16)],
        ),
        compiler_params=pltpu.CompilerParams(
            dimension_semantics=("parallel",),
            vmem_limit_bytes=vmem_limit,
        ),
        cost_estimate=pl.CostEstimate(
            flops=flops, transcendentals=0, bytes_accessed=bytes_accessed),
    )(xps, w1_k, b1_k, w2_k, b2_k)

    # Output is already NCHW per sample with a flattened lane-dense spatial dim; this
    # reshape is free (pure metadata), no transpose needed.
    return out.reshape(N, Cout, Ho, Wo)


def reference(x, w1, b1, w2, b2):
    dn = ('NCHW', 'OIHW', 'NCHW')
    y = lax.conv_general_dilated(x, w1, (2, 2), ((1, 1), (1, 1)), dimension_numbers=dn)
    y = y + b1[None, :, None, None]
    y = jnp.where(y > 0, y, NEG_SLOPE * y)
    z = lax.conv_general_dilated(y, w2, (1, 1), ((1, 1), (1, 1)), dimension_numbers=dn)
    z = z + b2[None, :, None, None]
    z = jnp.where(z > 0, z, NEG_SLOPE * z)
    return z


if __name__ == "__main__":
    N, Cin, H, W = 2, 4, 16, 16
    Cout = 8

    key = jax.random.PRNGKey(0)
    kx, k1, k2, k3, k4 = jax.random.split(key, 5)

    x = jax.random.normal(kx, (N, Cin, H, W), dtype=jnp.float32)
    w1 = 0.02 * jax.random.normal(k1, (Cout, Cin, 3, 3), dtype=jnp.float32)
    b1 = 0.01 * jax.random.normal(k2, (Cout,), dtype=jnp.float32)
    w2 = 0.02 * jax.random.normal(k3, (Cout, Cout, 3, 3), dtype=jnp.float32)
    b2 = 0.01 * jax.random.normal(k4, (Cout,), dtype=jnp.float32)

    out = downsample(x, w1, b1, w2, b2)
    out = jax.block_until_ready(out)

    ref = reference(x, w1, b1, w2, b2)
    assert out.shape == (N, Cout, H // 2, W // 2), out.shape
    max_err = float(jnp.max(jnp.abs(out - ref)))
    # bf16 matmul operands with f32 accumulation: expected max abs error ~2e-4 at these scales.
    assert jnp.allclose(out, ref, atol=2e-3, rtol=2e-3), f"mismatch vs reference: {max_err}"

    print("KERNEL_OK")
</pallas_src>

<mosaic_0001>
module attributes {stable_mosaic.version = 11 : i64} {
  func.func @_downsample_kernel(%arg0: i32, %arg1: memref<1x4x4x9x9xbf16, #tpu.memory_space<vmem>>, %arg2: memref<8x36xbf16, #tpu.memory_space<vmem>>, %arg3: memref<8x1xf32, #tpu.memory_space<vmem>>, %arg4: memref<8x72xbf16, #tpu.memory_space<vmem>>, %arg5: memref<8x1xf32, #tpu.memory_space<vmem>>, %arg6: memref<1x8x64xf32, #tpu.memory_space<vmem>>, %arg7: memref<8x10x10xbf16, #tpu.memory_space<vmem>>) attributes {dimension_semantics = [#tpu.dimension_semantics<parallel>], iteration_bounds = array<i64: 2>, scalar_prefetch = 0 : i64, scratch_operands = 1 : i64, tpu.core_type = #tpu.core_type<tc>, window_params = [{transform_indices = @transform_0, window_bounds = array<i64: 1, 4, 4, 9, 9>}, {pipeline_mode = #tpu.pipeline_mode<synchronous>, transform_indices = @transform_1, window_bounds = array<i64: 8, 36>}, {pipeline_mode = #tpu.pipeline_mode<synchronous>, transform_indices = @transform_2, window_bounds = array<i64: 8, 1>}, {pipeline_mode = #tpu.pipeline_mode<synchronous>, transform_indices = @transform_3, window_bounds = array<i64: 8, 72>}, {pipeline_mode = #tpu.pipeline_mode<synchronous>, transform_indices = @transform_4, window_bounds = array<i64: 8, 1>}, {transform_indices = @transform_5, window_bounds = array<i64: 1, 8, 64>}]} {
    %c0 = arith.constant 0 : index
    %c0_0 = arith.constant 0 : index
    %c0_1 = arith.constant 0 : index
    %c0_2 = arith.constant 0 : index
    %c0_3 = arith.constant 0 : index
    %0 = vector.load %arg1[%c0, %c0_0, %c0_1, %c0_2, %c0_3] : memref<1x4x4x9x9xbf16, #tpu.memory_space<vmem>>, vector<1x1x4x8x8xbf16>
    %1 = vector.shape_cast %0 : vector<1x1x4x8x8xbf16> to vector<4x8x8xbf16>
    %c0_4 = arith.constant 0 : index
    %c1 = arith.constant 1 : index
    %c0_5 = arith.constant 0 : index
    %c0_6 = arith.constant 0 : index
    %c0_7 = arith.constant 0 : index
    %2 = vector.load %arg1[%c0_4, %c1, %c0_5, %c0_6, %c0_7] : memref<1x4x4x9x9xbf16, #tpu.memory_space<vmem>>, vector<1x1x4x8x8xbf16>
    %3 = vector.shape_cast %2 : vector<1x1x4x8x8xbf16> to vector<4x8x8xbf16>
    %c0_8 = arith.constant 0 : index
    %c0_9 = arith.constant 0 : index
    %c0_10 = arith.constant 0 : index
    %c0_11 = arith.constant 0 : index
    %c1_12 = arith.constant 1 : index
    %4 = vector.load %arg1[%c0_8, %c0_9, %c0_10, %c0_11, %c1_12] : memref<1x4x4x9x9xbf16, #tpu.memory_space<vmem>>, vector<1x1x4x8x8xbf16>
    %5 = vector.shape_cast %4 : vector<1x1x4x8x8xbf16> to vector<4x8x8xbf16>
    %c0_13 = arith.constant 0 : index
    %c2 = arith.constant 2 : index
    %c0_14 = arith.constant 0 : index
    %c0_15 = arith.constant 0 : index
    %c0_16 = arith.constant 0 : index
    %6 = vector.load %arg1[%c0_13, %c2, %c0_14, %c0_15, %c0_16] : memref<1x4x4x9x9xbf16, #tpu.memory_space<vmem>>, vector<1x1x4x8x8xbf16>
    %7 = vector.shape_cast %6 : vector<1x1x4x8x8xbf16> to vector<4x8x8xbf16>
    %c0_17 = arith.constant 0 : index
    %c3 = arith.constant 3 : index
    %c0_18 = arith.constant 0 : index
    %c0_19 = arith.constant 0 : index
    %c0_20 = arith.constant 0 : index
    %8 = vector.load %arg1[%c0_17, %c3, %c0_18, %c0_19, %c0_20] : memref<1x4x4x9x9xbf16, #tpu.memory_space<vmem>>, vector<1x1x4x8x8xbf16>
    %9 = vector.shape_cast %8 : vector<1x1x4x8x8xbf16> to vector<4x8x8xbf16>
    %c0_21 = arith.constant 0 : index
    %c2_22 = arith.constant 2 : index
    %c0_23 = arith.constant 0 : index
    %c0_24 = arith.constant 0 : index
    %c1_25 = arith.constant 1 : index
    %10 = vector.load %arg1[%c0_21, %c2_22, %c0_23, %c0_24, %c1_25] : memref<1x4x4x9x9xbf16, #tpu.memory_space<vmem>>, vector<1x1x4x8x8xbf16>
    %11 = vector.shape_cast %10 : vector<1x1x4x8x8xbf16> to vector<4x8x8xbf16>
    %c0_26 = arith.constant 0 : index
    %c0_27 = arith.constant 0 : index
    %c0_28 = arith.constant 0 : index
    %c1_29 = arith.constant 1 : index
    %c0_30 = arith.constant 0 : index
    %12 = vector.load %arg1[%c0_26, %c0_27, %c0_28, %c1_29, %c0_30] : memref<1x4x4x9x9xbf16, #tpu.memory_space<vmem>>, vector<1x1x4x8x8xbf16>
    %13 = vector.shape_cast %12 : vector<1x1x4x8x8xbf16> to vector<4x8x8xbf16>
    %c0_31 = arith.constant 0 : index
    %c1_32 = arith.constant 1 : index
    %c0_33 = arith.constant 0 : index
    %c1_34 = arith.constant 1 : index
    %c0_35 = arith.constant 0 : index
    %14 = vector.load %arg1[%c0_31, %c1_32, %c0_33, %c1_34, %c0_35] : memref<1x4x4x9x9xbf16, #tpu.memory_space<vmem>>, vector<1x1x4x8x8xbf16>
    %15 = vector.shape_cast %14 : vector<1x1x4x8x8xbf16> to vector<4x8x8xbf16>
    %c0_36 = arith.constant 0 : index
    %c0_37 = arith.constant 0 : index
    %c0_38 = arith.constant 0 : index
    %c1_39 = arith.constant 1 : index
    %c1_40 = arith.constant 1 : index
    %16 = vector.load %arg1[%c0_36, %c0_37, %c0_38, %c1_39, %c1_40] : memref<1x4x4x9x9xbf16, #tpu.memory_space<vmem>>, vector<1x1x4x8x8xbf16>
    %17 = vector.shape_cast %16 : vector<1x1x4x8x8xbf16> to vector<4x8x8xbf16>
    %18 = tpu.concatenate %1, %3, %5, %7, %9, %11, %13, %15, %17 in 0 : vector<4x8x8xbf16>, vector<4x8x8xbf16>, vector<4x8x8xbf16>, vector<4x8x8xbf16>, vector<4x8x8xbf16>, vector<4x8x8xbf16>, vector<4x8x8xbf16>, vector<4x8x8xbf16>, vector<4x8x8xbf16> -> vector<36x8x8xbf16>
    %19 = vector.shape_cast %18 : vector<36x8x8xbf16> to vector<36x64xbf16>
    %c0_41 = arith.constant 0 : index
    %c0_42 = arith.constant 0 : index
    %20 = vector.load %arg2[%c0_41, %c0_42] : memref<8x36xbf16, #tpu.memory_space<vmem>>, vector<8x36xbf16>
    %cst = arith.constant dense<0.000000e+00> : vector<8x64xf32>
    %21 = tpu.matmul %20, %19, %cst {dimension_numbers = #tpu.dot_dimension_numbers<[1], [0], [0], [1], [0, 0, 1, 1], [], []>} : vector<8x36xbf16>, vector<36x64xbf16>, vector<8x64xf32> -> vector<8x64xf32>
    %c0_43 = arith.constant 0 : index
    %c0_44 = arith.constant 0 : index
    %22 = vector.load %arg3[%c0_43, %c0_44] : memref<8x1xf32, #tpu.memory_space<vmem>>, vector<8x1xf32>
    %23 = vector.broadcast %22 : vector<8x1xf32> to vector<8x64xf32>
    %24 = arith.addf %21, %23 : vector<8x64xf32>
    %cst_45 = arith.constant 2.000000e-01 : f32
    %25 = vector.broadcast %cst_45 : f32 to vector<8x64xf32>
    %26 = arith.mulf %25, %24 : vector<8x64xf32>
    %27 = arith.maximumf %24, %26 : vector<8x64xf32>
    %cst_46 = arith.constant 0.000000e+00 : bf16
    %28 = vector.broadcast %cst_46 : bf16 to vector<8x1x10xbf16>
    %cst_47 = arith.constant 0.000000e+00 : bf16
    %29 = vector.broadcast %cst_47 : bf16 to vector<8x8x1xbf16>
    %c0_48 = arith.constant 0 : index
    %c0_49 = arith.constant 0 : index
    %c0_50 = arith.constant 0 : index
    %30 = vector.load %arg7[%c0_48, %c0_49, %c0_50] : memref<8x10x10xbf16, #tpu.memory_space<vmem>>, vector<8x1x10xbf16>
    tpu.vector_store %arg7[%c0_48, %c0_49, %c0_50], %28 {strides = array<i32>} : memref<8x10x10xbf16, #tpu.memory_space<vmem>>, vector<8x1x10xbf16>,
    %c0_51 = arith.constant 0 : index
    %c9 = arith.constant 9 : index
    %c0_52 = arith.constant 0 : index
    %31 = vector.load %arg7[%c0_51, %c9, %c0_52] : memref<8x10x10xbf16, #tpu.memory_space<vmem>>, vector<8x1x10xbf16>
    tpu.vector_store %arg7[%c0_51, %c9, %c0_52], %28 {strides = array<i32>} : memref<8x10x10xbf16, #tpu.memory_space<vmem>>, vector<8x1x10xbf16>,
    %c0_53 = arith.constant 0 : index
    %c1_54 = arith.constant 1 : index
    %c0_55 = arith.constant 0 : index
    %32 = vector.load %arg7[%c0_53, %c1_54, %c0_55] : memref<8x10x10xbf16, #tpu.memory_space<vmem>>, vector<8x8x1xbf16>
    tpu.vector_store %arg7[%c0_53, %c1_54, %c0_55], %29 {strides = array<i32>} : memref<8x10x10xbf16, #tpu.memory_space<vmem>>, vector<8x8x1xbf16>,
    %c0_56 = arith.constant 0 : index
    %c1_57 = arith.constant 1 : index
    %c9_58 = arith.constant 9 : index
    %33 = vector.load %arg7[%c0_56, %c1_57, %c9_58] : memref<8x10x10xbf16, #tpu.memory_space<vmem>>, vector<8x8x1xbf16>
    tpu.vector_store %arg7[%c0_56, %c1_57, %c9_58], %29 {strides = array<i32>} : memref<8x10x10xbf16, #tpu.memory_space<vmem>>, vector<8x8x1xbf16>,
    %34 = arith.truncf %27 : vector<8x64xf32> to vector<8x64xbf16>
    %35 = vector.shape_cast %34 : vector<8x64xbf16> to vector<8x8x8xbf16>
    %c0_59 = arith.constant 0 : index
    %c1_60 = arith.constant 1 : index
    %c1_61 = arith.constant 1 : index
    %36 = vector.load %arg7[%c0_59, %c1_60, %c1_61] : memref<8x10x10xbf16, #tpu.memory_space<vmem>>, vector<8x8x8xbf16>
    tpu.vector_store %arg7[%c0_59, %c1_60, %c1_61], %35 {strides = array<i32>} : memref<8x10x10xbf16, #tpu.memory_space<vmem>>, vector<8x8x8xbf16>,
    %c0_62 = arith.constant 0 : index
    %c0_63 = arith.constant 0 : index
    %c0_64 = arith.constant 0 : index
    %37 = vector.load %arg7[%c0_62, %c0_63, %c0_64] : memref<8x10x10xbf16, #tpu.memory_space<vmem>>, vector<8x8x8xbf16>
    %c0_65 = arith.constant 0 : index
    %c0_66 = arith.constant 0 : index
    %c1_67 = arith.constant 1 : index
    %38 = vector.load %arg7[%c0_65, %c0_66, %c1_67] : memref<8x10x10xbf16, #tpu.memory_space<vmem>>, vector<8x8x8xbf16>
    %c0_68 = arith.constant 0 : index
    %c0_69 = arith.constant 0 : index
    %c2_70 = arith.constant 2 : index
    %39 = vector.load %arg7[%c0_68, %c0_69, %c2_70] : memref<8x10x10xbf16, #tpu.memory_space<vmem>>, vector<8x8x8xbf16>
    %c0_71 = arith.constant 0 : index
    %c1_72 = arith.constant 1 : index
    %c0_73 = arith.constant 0 : index
    %40 = vector.load %arg7[%c0_71, %c1_72, %c0_73] : memref<8x10x10xbf16, #tpu.memory_space<vmem>>, vector<8x8x8xbf16>
    %c0_74 = arith.constant 0 : index
    %c1_75 = arith.constant 1 : index
    %c1_76 = arith.constant 1 : index
    %41 = vector.load %arg7[%c0_74, %c1_75, %c1_76] : memref<8x10x10xbf16, #tpu.memory_space<vmem>>, vector<8x8x8xbf16>
    %c0_77 = arith.constant 0 : index
    %c1_78 = arith.constant 1 : index
    %c2_79 = arith.constant 2 : index
    %42 = vector.load %arg7[%c0_77, %c1_78, %c2_79] : memref<8x10x10xbf16, #tpu.memory_space<vmem>>, vector<8x8x8xbf16>
    %c0_80 = arith.constant 0 : index
    %c2_81 = arith.constant 2 : index
    %c0_82 = arith.constant 0 : index
    %43 = vector.load %arg7[%c0_80, %c2_81, %c0_82] : memref<8x10x10xbf16, #tpu.memory_space<vmem>>, vector<8x8x8xbf16>
    %c0_83 = arith.constant 0 : index
    %c2_84 = arith.constant 2 : index
    %c1_85 = arith.constant 1 : index
    %44 = vector.load %arg7[%c0_83, %c2_84, %c1_85] : memref<8x10x10xbf16, #tpu.memory_space<vmem>>, vector<8x8x8xbf16>
    %c0_86 = arith.constant 0 : index
    %c2_87 = arith.constant 2 : index
    %c2_88 = arith.constant 2 : index
    %45 = vector.load %arg7[%c0_86, %c2_87, %c2_88] : memref<8x10x10xbf16, #tpu.memory_space<vmem>>, vector<8x8x8xbf16>
    %46 = tpu.concatenate %37, %38, %39, %40, %41, %42, %43, %44, %45 in 0 : vector<8x8x8xbf16>, vector<8x8x8xbf16>, vector<8x8x8xbf16>, vector<8x8x8xbf16>, vector<8x8x8xbf16>, vector<8x8x8xbf16>, vector<8x8x8xbf16>, vector<8x8x8xbf16>, vector<8x8x8xbf16> -> vector<72x8x8xbf16>
    %47 = vector.shape_cast %46 : vector<72x8x8xbf16> to vector<72x64xbf16>
    %c0_89 = arith.constant 0 : index
    %c0_90 = arith.constant 0 : index
    %48 = vector.load %arg4[%c0_89, %c0_90] : memref<8x72xbf16, #tpu.memory_space<vmem>>, vector<8x72xbf16>
    %cst_91 = arith.constant dense<0.000000e+00> : vector<8x64xf32>
    %49 = tpu.matmul %48, %47, %cst_91 {dimension_numbers = #tpu.dot_dimension_numbers<[1], [0], [0], [1], [0, 0, 1, 1], [], []>} : vector<8x72xbf16>, vector<72x64xbf16>, vector<8x64xf32> -> vector<8x64xf32>
    %c0_92 = arith.constant 0 : index
    %c0_93 = arith.constant 0 : index
    %50 = vector.load %arg5[%c0_92, %c0_93] : memref<8x1xf32, #tpu.memory_space<vmem>>, vector<8x1xf32>
    %51 = vector.broadcast %50 : vector<8x1xf32> to vector<8x64xf32>
    %52 = arith.addf %49, %51 : vector<8x64xf32>
    %cst_94 = arith.constant 2.000000e-01 : f32
    %53 = vector.broadcast %cst_94 : f32 to vector<8x64xf32>
    %54 = arith.mulf %53, %52 : vector<8x64xf32>
    %55 = arith.maximumf %52, %54 : vector<8x64xf32>
    %c0_95 = arith.constant 0 : index
    %c0_96 = arith.constant 0 : index
    %c0_97 = arith.constant 0 : index
    %56 = vector.load %arg6[%c0_95, %c0_96, %c0_97] : memref<1x8x64xf32, #tpu.memory_space<vmem>>, vector<1x8x64xf32>
    %57 = vector.shape_cast %56 : vector<1x8x64xf32> to vector<8x64xf32>
    %58 = vector.shape_cast %55 : vector<8x64xf32> to vector<1x8x64xf32>
    tpu.vector_store %arg6[%c0_95, %c0_96, %c0_97], %58 {strides = array<i32>} : memref<1x8x64xf32, #tpu.memory_space<vmem>>, vector<1x8x64xf32>,
    return
  }
  func.func @transform_0(%arg0: i32) -> (i32, i32, i32, i32, i32) {
    %c0_i32 = arith.constant 0 : i32
    %c0_i32_0 = arith.constant 0 : i32
    %c0_i32_1 = arith.constant 0 : i32
    %c0_i32_2 = arith.constant 0 : i32
    %c0_i32_3 = arith.constant 0 : i32
    return %arg0, %c0_i32, %c0_i32_0, %c0_i32_1, %c0_i32_2 : i32, i32, i32, i32, i32
  }
  func.func @transform_1(%arg0: i32) -> (i32, i32) {
    %c0_i32 = arith.constant 0 : i32
    %c0_i32_0 = arith.constant 0 : i32
    %c0_i32_1 = arith.constant 0 : i32
    return %c0_i32, %c0_i32_0 : i32, i32
  }
  func.func @transform_2(%arg0: i32) -> (i32, i32) {
    %c0_i32 = arith.constant 0 : i32
    %c0_i32_0 = arith.constant 0 : i32
    %c0_i32_1 = arith.constant 0 : i32
    return %c0_i32, %c0_i32_0 : i32, i32
  }
  func.func @transform_3(%arg0: i32) -> (i32, i32) {
    %c0_i32 = arith.constant 0 : i32
    %c0_i32_0 = arith.constant 0 : i32
    %c0_i32_1 = arith.constant 0 : i32
    return %c0_i32, %c0_i32_0 : i32, i32
  }
  func.func @transform_4(%arg0: i32) -> (i32, i32) {
    %c0_i32 = arith.constant 0 : i32
    %c0_i32_0 = arith.constant 0 : i32
    %c0_i32_1 = arith.constant 0 : i32
    return %c0_i32, %c0_i32_0 : i32, i32
  }
  func.func @transform_5(%arg0: i32) -> (i32, i32, i32) {
    %c0_i32 = arith.constant 0 : i32
    %c0_i32_0 = arith.constant 0 : i32
    %c0_i32_1 = arith.constant 0 : i32
    return %arg0, %c0_i32, %c0_i32_0 : i32, i32, i32
  }
}

</mosaic_0001>

<llo_original>
// kernel: tpu_custom_call.1
$region0: #{tpu_custom_call.1}
  #allocation0 [shape = 'u32[]', space=smem, size = 0x4, offset = 0x4, fixed_abs, tag = 'smem constant byte address 0x4 - core index']
  #allocation1 [shape = 'u32[144,128]{1,0:T(1,128)}', space=vmem, size = 0x12000, scoped, tag = 'internal scratch']
  #allocation2 [shape = 'bf16[8,10,10]{2,1,0:T(8,128)(2,1)}', space=vmem, size = 0x8000, scoped, tag = 'scratch operand']
  %s0 = inlined_call_operand.vmem [shape: bf16[2,4,4,9,9], index: 0, kind: input, shape index: {}]
  %s1 = inlined_call_operand.vmem [shape: bf16[8,36], index: 1, kind: input, shape index: {}]
  %s2 = inlined_call_operand.vmem [shape: f32[8,1], index: 2, kind: input, shape index: {}]
  %s3 = inlined_call_operand.vmem [shape: bf16[8,72], index: 3, kind: input, shape index: {}]
  %s4 = inlined_call_operand.vmem [shape: f32[8,1], index: 4, kind: input, shape index: {}]
  %s5 = inlined_call_operand.hbm [shape: f32[2,8,64], index: 5, kind: output, shape index: {}]
  %s6 = sld [smem:[#allocation0]]
  $region53: #{tpu_custom_call.1} parent=0
    _
  %s8 = ssub.s32 1, %s6
  %s9 = scalar_select 0, %s8, %s6
  $region1: #{tpu_custom_call.1} parent=0
    #allocation3 [shape = 'u8[8192]{0}', space=vmem, size = 0x2000, scoped, tag = 'output window, operand 0']
    #allocation4 [shape = 's32[2]{0}', space=sflag, size = 0x8, scoped, tag = 'scoped memory for tpu_custom_call.1']
    %10 = vsyncpa [#allocation4], 0
    %s11 = scalar_lea.sflag [#allocation4], 1
    %12 = vsyncpa %s11, 0
    loop: start=0, step=1, limit=4
    $region2: #{tpu_custom_call.1} parent=1 // loop_pre_header
      _
    $region3: #{tpu_custom_call.1} parent=1 // loop_header
      %s14 = sphi 0, %s18
      %p15 = scmp.ge.s32.totalorder %s14, 4
      %s24 = sphi 0, %s26
      %s27 = sphi 0, %s24
      %s28 = sphi 0, %s27
      %s44 = sphi 0, %s28
      %s48 = sphi 0, %s48
      %s50 = sphi 0, %s48
      %s51 = sphi 0, %s50
      %s65 = sphi 0, %s51
      %s69 = sphi 0, %s69
      %s71 = sphi 0, %s69
      %s72 = sphi 0, %s71
      %s86 = sphi 0, %s72
      %s90 = sphi 0, %s90
      %s92 = sphi 0, %s90
      %s93 = sphi 0, %s92
      %s107 = sphi 0, %s93
      %s111 = sphi 0, %s111
      %s113 = sphi 0, %s111
      %s114 = sphi 0, %s113
      %s128 = sphi 0, %s114
      %s134 = sphi 0, %s136
      %s137 = sphi 0, %s134
      %s138 = sphi 0, %s137
      %s154 = sphi 0, %s138
    $region4: #{tpu_custom_call.1} parent=1 // loop_header_branch
      %17 = sbr.rel (%p15) target = $region8
    $region5: #{tpu_custom_call.1} parent=1 // loop_body
      %s19 = ssub.s32 %s14, 1
      %s20 = ssub.s32 %s14, 2
      %s21 = sadd.s32 %s14, 1
      %s22 = ssub.s32 %s14, %s21
      %p23 = scmp.eq.s32.totalorder %s22, 0
      %s25 = sadd.s32 %s24, 1
      %s26 = scalar_select %p23, %s24, %s25
      %p29 = pneg %p23
      %p30 = scmp.eq.s32.totalorder %s14, 1
      %p31 = por %p29, %p30
      %p32 = scmp.ne.s32.totalorder %s24, %s27
      %p33 = scmp.eq.s32.totalorder %s14, 0
      %p34 = por %p32, %p33
      %p35 = scmp.ne.s32.totalorder %s24, %s27
      %p36 = scmp.eq.s32.totalorder %s19, 1
      %p37 = por %p35, %p36
      %p38 = scmp.ne.s32.totalorder %s27, %s28
      %p39 = scmp.eq.s32.totalorder %s19, 0
      %p40 = por %p38, %p39
      %p41 = scmp.ne.s32.totalorder %s27, %s28
      %p42 = scmp.eq.s32.totalorder %s20, 1
      %p43 = por %p41, %p42
      %p45 = scmp.ne.s32.totalorder %s28, %s44
      %p46 = scmp.eq.s32.totalorder %s20, 0
      %p47 = por %p45, %p46
      %s49 = sadd.s32 %s48, 1
      %p52 = scmp.eq.s32.totalorder %s14, 1
      %p53 = scmp.ne.s32.totalorder %s48, %s50
      %p54 = scmp.eq.s32.totalorder %s14, 0
      %p55 = por %p53, %p54
      %p56 = scmp.ne.s32.totalorder %s48, %s50
      %p57 = scmp.eq.s32.totalorder %s19, 1
      %p58 = por %p56, %p57
      %p59 = scmp.ne.s32.totalorder %s50, %s51
      %p60 = scmp.eq.s32.totalorder %s19, 0
      %p61 = por %p59, %p60
      %p62 = scmp.ne.s32.totalorder %s50, %s51
      %p63 = scmp.eq.s32.totalorder %s20, 1
      %p64 = por %p62, %p63
      %p66 = scmp.ne.s32.totalorder %s51, %s65
      %p67 = scmp.eq.s32.totalorder %s20, 0
      %p68 = por %p66, %p67
      %s70 = sadd.s32 %s69, 1
      %p73 = scmp.eq.s32.totalorder %s14, 1
      %p74 = scmp.ne.s32.totalorder %s69, %s71
      %p75 = scmp.eq.s32.totalorder %s14, 0
      %p76 = por %p74, %p75
      %p77 = scmp.ne.s32.totalorder %s69, %s71
      %p78 = scmp.eq.s32.totalorder %s19, 1
      %p79 = por %p77, %p78
      %p80 = scmp.ne.s32.totalorder %s71, %s72
      %p81 = scmp.eq.s32.totalorder %s19, 0
      %p82 = por %p80, %p81
      %p83 = scmp.ne.s32.totalorder %s71, %s72
      %p84 = scmp.eq.s32.totalorder %s20, 1
      %p85 = por %p83, %p84
      %p87 = scmp.ne.s32.totalorder %s72, %s86
      %p88 = scmp.eq.s32.totalorder %s20, 0
      %p89 = por %p87, %p88
      %s91 = sadd.s32 %s90, 1
      %p94 = scmp.eq.s32.totalorder %s14, 1
      %p95 = scmp.ne.s32.totalorder %s90, %s92
      %p96 = scmp.eq.s32.totalorder %s14, 0
      %p97 = por %p95, %p96
      %p98 = scmp.ne.s32.totalorder %s90, %s92
      %p99 = scmp.eq.s32.totalorder %s19, 1
      %p100 = por %p98, %p99
      %p101 = scmp.ne.s32.totalorder %s92, %s93
      %p102 = scmp.eq.s32.totalorder %s19, 0
      %p103 = por %p101, %p102
      %p104 = scmp.ne.s32.totalorder %s92, %s93
      %p105 = scmp.eq.s32.totalorder %s20, 1
      %p106 = por %p104, %p105
      %p108 = scmp.ne.s32.totalorder %s93, %s107
      %p109 = scmp.eq.s32.totalorder %s20, 0
      %p110 = por %p108, %p109
      %s112 = sadd.s32 %s111, 1
      %p115 = scmp.eq.s32.totalorder %s14, 1
      %p116 = scmp.ne.s32.totalorder %s111, %s113
      %p117 = scmp.eq.s32.totalorder %s14, 0
      %p118 = por %p116, %p117
      %p119 = scmp.ne.s32.totalorder %s111, %s113
      %p120 = scmp.eq.s32.totalorder %s19, 1
      %p121 = por %p119, %p120
      %p122 = scmp.ne.s32.totalorder %s113, %s114
      %p123 = scmp.eq.s32.totalorder %s19, 0
      %p124 = por %p122, %p123
      %p125 = scmp.ne.s32.totalorder %s113, %s114
      %p126 = scmp.eq.s32.totalorder %s20, 1
      %p127 = por %p125, %p126
      %p129 = scmp.ne.s32.totalorder %s114, %s128
      %p130 = scmp.eq.s32.totalorder %s20, 0
      %p131 = por %p129, %p130
      %s132 = ssub.s32 %s14, %s21
      %p133 = scmp.eq.s32.totalorder %s132, 0
      %s135 = sadd.s32 %s134, 1
      %s136 = scalar_select %p133, %s134, %s135
      %p139 = pneg %p133
      %p140 = scmp.eq.s32.totalorder %s14, 1
      %p141 = por %p139, %p140
      %p142 = scmp.ne.s32.totalorder %s134, %s137
      %p143 = scmp.eq.s32.totalorder %s14, 0
      %p144 = por %p142, %p143
      %p145 = scmp.ne.s32.totalorder %s134, %s137
      %p146 = scmp.eq.s32.totalorder %s19, 1
      %p147 = por %p145, %p146
      %p148 = scmp.ne.s32.totalorder %s137, %s138
      %p149 = scmp.eq.s32.totalorder %s19, 0
      %p150 = por %p148, %p149
      %p151 = scmp.ne.s32.totalorder %s137, %s138
      %p152 = scmp.eq.s32.totalorder %s20, 1
      %p153 = por %p151, %p152
      %p155 = scmp.ne.s32.totalorder %s138, %s154
      %p156 = scmp.eq.s32.totalorder %s20, 0
      %p157 = por %p155, %p156
      %p158 = scmp.le.s32.totalorder 1, %s14
      %p159 = scmp.lt.s32.totalorder %s14, 3
      %p160 = pnand %p158, %p159
      %p161 = pneg %p160
      // Predicated region
      $region9: #{tpu_custom_call.1} parent=5 // pred_check
        _
      $region10: #{tpu_custom_call.1} parent=5 // pred_check_branch
        %163 = sbr.rel (%p160) target = $region12
      $region11: #{tpu_custom_call.1} parent=5 // pred_region
        %s164 = ssub.s32 %s14, 1
        // Predicated region
        $region13: #{tpu_custom_call.1} parent=11 // pred_check
          %p165 = pneg %p61
        $region14: #{tpu_custom_call.1} parent=11 // pred_check_branch
          %167 = sbr.rel (%p165) target = $region16
        $region15: #{tpu_custom_call.1} parent=11 // pred_region
          _
        $region16: #{tpu_custom_call.1} parent=11 // pred_fallthru
          _
        // Predicated region
        $region17: #{tpu_custom_call.1} parent=11 // pred_check
          %p168 = pneg %p82
        $region18: #{tpu_custom_call.1} parent=11 // pred_check_branch
          %170 = sbr.rel (%p168) target = $region20
        $region19: #{tpu_custom_call.1} parent=11 // pred_region
          _
        $region20: #{tpu_custom_call.1} parent=11 // pred_fallthru
          _
        // Predicated region
        $region21: #{tpu_custom_call.1} parent=11 // pred_check
          %p171 = pneg %p103
        $region22: #{tpu_custom_call.1} parent=11 // pred_check_branch
          %173 = sbr.rel (%p171) target = $region24
        $region23: #{tpu_custom_call.1} parent=11 // pred_region
          _
        $region24: #{tpu_custom_call.1} parent=11 // pred_fallthru
          _
        // Predicated region
        $region25: #{tpu_custom_call.1} parent=11 // pred_check
          %p174 = pneg %p124
        $region26: #{tpu_custom_call.1} parent=11 // pred_check_branch
          %176 = sbr.rel (%p174) target = $region28
        $region27: #{tpu_custom_call.1} parent=11 // pred_region
          _
        $region28: #{tpu_custom_call.1} parent=11 // pred_fallthru
          _
      $region12: #{tpu_custom_call.1} parent=5 // pred_fallthru
        _
      %p177 = scmp.lt.s32.totalorder %s14, 2
      // Predicated region
      $region29: #{tpu_custom_call.1} parent=5 // pred_check
        %p178 = pneg %p177
      $region30: #{tpu_custom_call.1} parent=5 // pred_check_branch
        %180 = sbr.rel (%p178) target = $region32
      $region31: #{tpu_custom_call.1} parent=5 // pred_region
        // Predicated region
        $region33: #{tpu_custom_call.1} parent=31 // pred_check
          %p181 = pneg %p34
        $region34: #{tpu_custom_call.1} parent=31 // pred_check_branch
          %183 = sbr.rel (%p181) target = $region36
        $region35: #{tpu_custom_call.1} parent=31 // pred_region
          %p184 = scmp.lt.s32.totalorder %s14, 1
          %s185 = scalar_select %p184, %s14, 1
          %s186 = smul.addr %s185, 32
          %s187 = smul.addr %s186, 4
          %s188 = scalar_lea.vmem %s0, %s187
        $region36: #{tpu_custom_call.1} parent=31 // pred_fallthru
          _
      $region32: #{tpu_custom_call.1} parent=5 // pred_fallthru
        _
      %p189 = scmp.le.s32.totalorder 1, %s14
      %p190 = scmp.lt.s32.totalorder %s14, 3
      %p191 = pnand %p189, %p190
      %p192 = pneg %p191
      // Predicated region
      $region37: #{tpu_custom_call.1} parent=5 // pred_check
        _
      $region38: #{tpu_custom_call.1} parent=5 // pred_check_branch
        %194 = sbr.rel (%p191) target = $region40
      $region39: #{tpu_custom_call.1} parent=5 // pred_region
        %s195 = ssub.s32 %s14, 1
        %p196 = scmp.lt.s32.totalorder %s19, 1
        %s197 = scalar_select %p196, %s19, 1
        %s198 = smul.addr %s197, 32
        %s199 = smul.addr %s198, 4
        %s200 = scalar_lea.vmem %s0, %s199
        %p201 = pneg %p40
        %p202 = pneg %p37
        %p203 = pneg %p61
        %p204 = pneg %p58
        %p205 = pneg %p82
        %p206 = pneg %p79
        %p207 = pneg %p103
        %p208 = pneg %p100
        %p209 = pneg %p124
        %p210 = pneg %p121
        %p211 = pneg %p150
        %p212 = pneg %p147
        %s213 = sand.u32 %s137, 1
        %s214 = scalar_lea.sflag [#allocation4], %s213
        %s215 = sand.u32 %s137, 1
        %s216 = smul.addr %s215, 8
        %s217 = scalar_lea.vmem [#allocation3], %s216
        %p218 = scmp.lt.s32.totalorder %s19, 1
        %s219 = scalar_select %p218, %s19, 1
        %s220 = smul.addr %s219, 32
        %s221 = smul.addr %s220, 4
        %s222 = scalar_lea.vmem %s0, %s221
        %v224 = vld [vmem:[%s222] sm:$0xf]
        %v225 = vld [vmem:[%s222 + $0x8] sm:$0xf]
        %v226 = vld [vmem:[%s222 + $0x10] sm:$0xf]
        %v227 = vld [vmem:[%s222 + $0x18] sm:$0xf]
        %s228 = scalar_lea.vmem %s222, 32
        %v229 = vld [vmem:[%s228] sm:$0xf]
        %v230 = vld [vmem:[%s228 + $0x8] sm:$0xf]
        %v231 = vld [vmem:[%s228 + $0x10] sm:$0xf]
        %v232 = vld [vmem:[%s228 + $0x18] sm:$0xf]
        %s233 = scalar_lea.vmem %s222, 64
        %v234 = vld [vmem:[%s233] sm:$0xf]
        %v235 = vld [vmem:[%s233 + $0x8] sm:$0xf]
        %v236 = vld [vmem:[%s233 + $0x10] sm:$0xf]
        %v237 = vld [vmem:[%s233 + $0x18] sm:$0xf]
        %s238 = scalar_lea.vmem %s222, 96
        %v239 = vld [vmem:[%s238] sm:$0xf]
        %v240 = vld [vmem:[%s238 + $0x8] sm:$0xf]
        %v241 = vld [vmem:[%s238 + $0x10] sm:$0xf]
        %v242 = vld [vmem:[%s238 + $0x18] sm:$0xf]
        %v243 = vld [vmem:[%s222 + $0x4] sm:$0x1]
        %v244 = vld [vmem:[%s222 + $0xc] sm:$0x1]
        %v245 = vld [vmem:[%s222 + $0x14] sm:$0x1]
        %v246 = vld [vmem:[%s222 + $0x1c] sm:$0x1]
        %v247 = vld [vmem:[%s228 + $0x4] sm:$0x1]
        %v248 = vld [vmem:[%s228 + $0xc] sm:$0x1]
        %v249 = vld [vmem:[%s228 + $0x14] sm:$0x1]
        %v250 = vld [vmem:[%s228 + $0x1c] sm:$0x1]
        %255 = vrot.lane.b32.xlu0 %v224, 127
        %v256 = vpop.permute.xlu0 %255
        %257 = vrot.lane.b32.xlu0 %v225, 127
        %v258 = vpop.permute.xlu0 %257
        %259 = vrot.lane.b32.xlu0 %v226, 127
        %v260 = vpop.permute.xlu0 %259
        %261 = vrot.lane.b32.xlu0 %v227, 127
        %v262 = vpop.permute.xlu0 %261
        %267 = vrot.lane.b32.xlu0 %v234, 127
        %v268 = vpop.permute.xlu0 %267
        %269 = vrot.lane.b32.xlu0 %v235, 127
        %v270 = vpop.permute.xlu0 %269
        %271 = vrot.lane.b32.xlu0 %v236, 127
        %v272 = vpop.permute.xlu0 %271
        %273 = vrot.lane.b32.xlu0 %v237, 127
        %v274 = vpop.permute.xlu0 %273
        %vm275 = vsmask.f32 3328
        %vm276 = vsmask.f32 7440
        %vm277 = vmor %vm275, %vm276
        %v279 = vshrl.u32 %v224, 16
        %v281 = vrot.slane %v279, 4
        %v282 = vshll.u32 %v224, 16
        %v284 = vrot.slane %v282, 5
        %v285 = vor.u32 %v281, %v284
        %v286 = vrot.slane %v285, 4
        %v288 = vshll.u32 %v243, 16
        %v290 = vrot.slane %v288, 5
        %v291 = vsel %vm277, %v286, %v290
        %v293 = vshrl.u32 %v225, 16
        %v295 = vrot.slane %v293, 4
        %v296 = vshll.u32 %v225, 16
        %v298 = vrot.slane %v296, 5
        %v299 = vor.u32 %v295, %v298
        %v300 = vrot.slane %v299, 4
        %v302 = vshll.u32 %v244, 16
        %v304 = vrot.slane %v302, 5
        %v305 = vsel %vm277, %v300, %v304
        %v307 = vshrl.u32 %v226, 16
        %v309 = vrot.slane %v307, 4
        %v310 = vshll.u32 %v226, 16
        %v312 = vrot.slane %v310, 5
        %v313 = vor.u32 %v309, %v312
        %v314 = vrot.slane %v313, 4
        %v316 = vshll.u32 %v245, 16
        %v318 = vrot.slane %v316, 5
        %v319 = vsel %vm277, %v314, %v318
        %v321 = vshrl.u32 %v227, 16
        %v323 = vrot.slane %v321, 4
        %v324 = vshll.u32 %v227, 16
        %v326 = vrot.slane %v324, 5
        %v327 = vor.u32 %v323, %v326
        %v328 = vrot.slane %v327, 4
        %v330 = vshll.u32 %v246, 16
        %v332 = vrot.slane %v330, 5
        %v333 = vsel %vm277, %v328, %v332
        %v335 = vshrl.u32 %v229, 16
        %v337 = vrot.slane %v335, 4
        %v338 = vshll.u32 %v229, 16
        %v340 = vrot.slane %v338, 5
        %v341 = vor.u32 %v337, %v340
        %v342 = vrot.slane %v341, 4
        %v344 = vshll.u32 %v247, 16
        %v346 = vrot.slane %v344, 5
        %v347 = vsel %vm277, %v342, %v346
        %v349 = vshrl.u32 %v230, 16
        %v351 = vrot.slane %v349, 4
        %v352 = vshll.u32 %v230, 16
        %v354 = vrot.slane %v352, 5
        %v355 = vor.u32 %v351, %v354
        %v356 = vrot.slane %v355, 4
        %v358 = vshll.u32 %v248, 16
        %v360 = vrot.slane %v358, 5
        %v361 = vsel %vm277, %v356, %v360
        %v363 = vshrl.u32 %v231, 16
        %v365 = vrot.slane %v363, 4
        %v366 = vshll.u32 %v231, 16
        %v368 = vrot.slane %v366, 5
        %v369 = vor.u32 %v365, %v368
        %v370 = vrot.slane %v369, 4
        %v372 = vshll.u32 %v249, 16
        %v374 = vrot.slane %v372, 5
        %v375 = vsel %vm277, %v370, %v374
        %v377 = vshrl.u32 %v232, 16
        %v379 = vrot.slane %v377, 4
        %v380 = vshll.u32 %v232, 16
        %v382 = vrot.slane %v380, 5
        %v383 = vor.u32 %v379, %v382
        %v384 = vrot.slane %v383, 4
        %v386 = vshll.u32 %v250, 16
        %v388 = vrot.slane %v386, 5
        %v389 = vsel %vm277, %v384, %v388
        %390 = vrot.lane.b32.xlu0 %v291, 127
        %v391 = vpop.permute.xlu0 %390
        %392 = vrot.lane.b32.xlu0 %v305, 127
        %v393 = vpop.permute.xlu0 %392
        %394 = vrot.lane.b32.xlu0 %v319, 127
        %v395 = vpop.permute.xlu0 %394
        %396 = vrot.lane.b32.xlu0 %v333, 127
        %v397 = vpop.permute.xlu0 %396
        %v398 = vpack.i.b16 %v225, %v224
        %v400 = vpack.i.b16 %v293, %v279
        %v402 = vpack.i.b16 %v227, %v226
        %v404 = vpack.i.b16 %v321, %v307
        %v406 = vpack.i.b16 %v230, %v229
        %v408 = vpack.i.b16 %v349, %v335
        %v410 = vpack.i.b16 %v232, %v231
        %v412 = vpack.i.b16 %v377, %v363
        %v416 = vpack.i.b16 %v258, %v256
        %v418 = vshrl.u32 %v256, 16
        %v419 = vshrl.u32 %v258, 16
        %v420 = vpack.i.b16 %v419, %v418
        %v424 = vpack.i.b16 %v262, %v260
        %v426 = vshrl.u32 %v260, 16
        %v427 = vshrl.u32 %v262, 16
        %v428 = vpack.i.b16 %v427, %v426
        %v432 = vpack.i.b16 %v235, %v234
        %v434 = vshrl.u32 %v234, 16
        %v435 = vshrl.u32 %v235, 16
        %v436 = vpack.i.b16 %v435, %v434
        %v440 = vpack.i.b16 %v237, %v236
        %v442 = vshrl.u32 %v236, 16
        %v443 = vshrl.u32 %v237, 16
        %v444 = vpack.i.b16 %v443, %v442
        %v448 = vpack.i.b16 %v240, %v239
        %v450 = vshrl.u32 %v239, 16
        %v451 = vshrl.u32 %v240, 16
        %v452 = vpack.i.b16 %v451, %v450
        %v456 = vpack.i.b16 %v242, %v241
        %v458 = vshrl.u32 %v241, 16
        %v459 = vshrl.u32 %v242, 16
        %v460 = vpack.i.b16 %v459, %v458
        %v464 = vpack.i.b16 %v270, %v268
        %v466 = vshrl.u32 %v268, 16
        %v467 = vshrl.u32 %v270, 16
        %v468 = vpack.i.b16 %v467, %v466
        %v472 = vpack.i.b16 %v274, %v272
        %v474 = vshrl.u32 %v272, 16
        %v475 = vshrl.u32 %v274, 16
        %v476 = vpack.i.b16 %v475, %v474
        %v480 = vpack.i.b16 %v305, %v291
        %v482 = vshrl.u32 %v291, 16
        %v483 = vshrl.u32 %v305, 16
        %v484 = vpack.i.b16 %v483, %v482
        %v488 = vpack.i.b16 %v333, %v319
        %v490 = vshrl.u32 %v319, 16
        %v491 = vshrl.u32 %v333, 16
        %v492 = vpack.i.b16 %v491, %v490
        %v496 = vpack.i.b16 %v361, %v347
        %v498 = vshrl.u32 %v347, 16
        %v499 = vshrl.u32 %v361, 16
        %v500 = vpack.i.b16 %v499, %v498
        %v504 = vpack.i.b16 %v389, %v375
        %v506 = vshrl.u32 %v375, 16
        %v507 = vshrl.u32 %v389, 16
        %v508 = vpack.i.b16 %v507, %v506
        %v512 = vpack.i.b16 %v393, %v391
        %v513 = vshrl.u32 %v391, 16
        %v514 = vshrl.u32 %v393, 16
        %v515 = vpack.i.b16 %v514, %v513
        %v518 = vpack.i.b16 %v397, %v395
        %v519 = vshrl.u32 %v395, 16
        %v520 = vshrl.u32 %v397, 16
        %v521 = vpack.i.b16 %v520, %v519
        %v522 = vcombine.low %v398, %v406
        %v524 = vunpack.c.l.s4 1983009808
        %v525 = vunpack.c.0.s8 %v524
        %v526 = vlaneseq
        %v527 = vshrl.u32 %v526, 7
        %v528 = vsub.s32 %v525, %v527
        %v529 = vrot.slane %v522, %v528
        %v530 = vcombine.low %v402, %v410
        %v532 = vunpack.c.l.s4 1983009808
        %v533 = vunpack.c.0.s8 %v532
        %v534 = vlaneseq
        %v535 = vshrl.u32 %v534, 7
        %v536 = vsub.s32 %v533, %v535
        %v537 = vrot.slane %v530, %v536
        %v538 = vcombine.low %v529, %v537
        %v539 = vcombine.high %v529, %v537
        %v541 = vunpack.c.l.s4 1934713408
        %v542 = vunpack.c.0.s8 %v541
        %v543 = vlaneseq
        %v544 = vshrl.u32 %v543, 7
        %v545 = vsub.s32 %v542, %v544
        %v546 = vrot.slane %v538, %v545
        %v548 = vunpack.c.l.s4 1934713408
        %v549 = vunpack.c.0.s8 %v548
        %v550 = vlaneseq
        %v551 = vshrl.u32 %v550, 7
        %v552 = vsub.s32 %v549, %v551
        %v553 = vrot.slane %v539, %v552
        %v554 = vcombine.high %v546, 0
        %v555 = vcombine.high %v553, 0
        %v556 = vcombine.low %v400, %v408
        %v558 = vunpack.c.l.s4 1983009808
        %v559 = vunpack.c.0.s8 %v558
        %v560 = vlaneseq
        %v561 = vshrl.u32 %v560, 7
        %v562 = vsub.s32 %v559, %v561
        %v563 = vrot.slane %v556, %v562
        %v564 = vcombine.low %v404, %v412
        %v566 = vunpack.c.l.s4 1983009808
        %v567 = vunpack.c.0.s8 %v566
        %v568 = vlaneseq
        %v569 = vshrl.u32 %v568, 7
        %v570 = vsub.s32 %v567, %v569
        %v571 = vrot.slane %v564, %v570
        %v572 = vcombine.low %v563, %v571
        %v573 = vcombine.high %v563, %v571
        %v575 = vunpack.c.l.s4 1934713408
        %v576 = vunpack.c.0.s8 %v575
        %v577 = vlaneseq
        %v578 = vshrl.u32 %v577, 7
        %v579 = vsub.s32 %v576, %v578
        %v580 = vrot.slane %v572, %v579
        %v582 = vunpack.c.l.s4 1934713408
        %v583 = vunpack.c.0.s8 %v582
        %v584 = vlaneseq
        %v585 = vshrl.u32 %v584, 7
        %v586 = vsub.s32 %v583, %v585
        %v587 = vrot.slane %v573, %v586
        %v588 = vcombine.high %v580, 0
        %v589 = vcombine.high %v587, 0
        %v590 = vcombine.low %v416, %v432
        %v592 = vunpack.c.l.s4 1983009808
        %v593 = vunpack.c.0.s8 %v592
        %v594 = vlaneseq
        %v595 = vshrl.u32 %v594, 7
        %v596 = vsub.s32 %v593, %v595
        %v597 = vrot.slane %v590, %v596
        %v598 = vcombine.low %v424, %v440
        %v600 = vunpack.c.l.s4 1983009808
        %v601 = vunpack.c.0.s8 %v600
        %v602 = vlaneseq
        %v603 = vshrl.u32 %v602, 7
        %v604 = vsub.s32 %v601, %v603
        %v605 = vrot.slane %v598, %v604
        %v606 = vcombine.low %v597, %v605
        %v607 = vcombine.high %v597, %v605
        %v609 = vunpack.c.l.s4 1934713408
        %v610 = vunpack.c.0.s8 %v609
        %v611 = vlaneseq
        %v612 = vshrl.u32 %v611, 7
        %v613 = vsub.s32 %v610, %v612
        %v614 = vrot.slane %v606, %v613
        %v616 = vunpack.c.l.s4 1934713408
        %v617 = vunpack.c.0.s8 %v616
        %v618 = vlaneseq
        %v619 = vshrl.u32 %v618, 7
        %v620 = vsub.s32 %v617, %v619
        %v621 = vrot.slane %v607, %v620
        %v622 = vcombine.high %v614, 0
        %v623 = vcombine.high %v621, 0
        %v624 = vcombine.low %v420, %v436
        %v626 = vunpack.c.l.s4 1983009808
        %v627 = vunpack.c.0.s8 %v626
        %v628 = vlaneseq
        %v629 = vshrl.u32 %v628, 7
        %v630 = vsub.s32 %v627, %v629
        %v631 = vrot.slane %v624, %v630
        %v632 = vcombine.low %v428, %v444
        %v634 = vunpack.c.l.s4 1983009808
        %v635 = vunpack.c.0.s8 %v634
        %v636 = vlaneseq
        %v637 = vshrl.u32 %v636, 7
        %v638 = vsub.s32 %v635, %v637
        %v639 = vrot.slane %v632, %v638
        %v640 = vcombine.low %v631, %v639
        %v641 = vcombine.high %v631, %v639
        %v643 = vunpack.c.l.s4 1934713408
        %v644 = vunpack.c.0.s8 %v643
        %v645 = vlaneseq
        %v646 = vshrl.u32 %v645, 7
        %v647 = vsub.s32 %v644, %v646
        %v648 = vrot.slane %v640, %v647
        %v650 = vunpack.c.l.s4 1934713408
        %v651 = vunpack.c.0.s8 %v650
        %v652 = vlaneseq
        %v653 = vshrl.u32 %v652, 7
        %v654 = vsub.s32 %v651, %v653
        %v655 = vrot.slane %v641, %v654
        %v656 = vcombine.high %v648, 0
        %v657 = vcombine.high %v655, 0
        %v658 = vcombine.low %v448, %v464
        %v660 = vunpack.c.l.s4 1983009808
        %v661 = vunpack.c.0.s8 %v660
        %v662 = vlaneseq
        %v663 = vshrl.u32 %v662, 7
        %v664 = vsub.s32 %v661, %v663
        %v665 = vrot.slane %v658, %v664
        %v666 = vcombine.low %v456, %v472
        %v668 = vunpack.c.l.s4 1983009808
        %v669 = vunpack.c.0.s8 %v668
        %v670 = vlaneseq
        %v671 = vshrl.u32 %v670, 7
        %v672 = vsub.s32 %v669, %v671
        %v673 = vrot.slane %v666, %v672
        %v674 = vcombine.low %v665, %v673
        %v675 = vcombine.high %v665, %v673
        %v677 = vunpack.c.l.s4 1934713408
        %v678 = vunpack.c.0.s8 %v677
        %v679 = vlaneseq
        %v680 = vshrl.u32 %v679, 7
        %v681 = vsub.s32 %v678, %v680
        %v682 = vrot.slane %v674, %v681
        %v684 = vunpack.c.l.s4 1934713408
        %v685 = vunpack.c.0.s8 %v684
        %v686 = vlaneseq
        %v687 = vshrl.u32 %v686, 7
        %v688 = vsub.s32 %v685, %v687
        %v689 = vrot.slane %v675, %v688
        %v690 = vcombine.high %v682, 0
        %v691 = vcombine.high %v689, 0
        %v692 = vcombine.low %v452, %v468
        %v694 = vunpack.c.l.s4 1983009808
        %v695 = vunpack.c.0.s8 %v694
        %v696 = vlaneseq
        %v697 = vshrl.u32 %v696, 7
        %v698 = vsub.s32 %v695, %v697
        %v699 = vrot.slane %v692, %v698
        %v700 = vcombine.low %v460, %v476
        %v702 = vunpack.c.l.s4 1983009808
        %v703 = vunpack.c.0.s8 %v702
        %v704 = vlaneseq
        %v705 = vshrl.u32 %v704, 7
        %v706 = vsub.s32 %v703, %v705
        %v707 = vrot.slane %v700, %v706
        %v708 = vcombine.low %v699, %v707
        %v709 = vcombine.high %v699, %v707
        %v711 = vunpack.c.l.s4 1934713408
        %v712 = vunpack.c.0.s8 %v711
        %v713 = vlaneseq
        %v714 = vshrl.u32 %v713, 7
        %v715 = vsub.s32 %v712, %v714
        %v716 = vrot.slane %v708, %v715
        %v718 = vunpack.c.l.s4 1934713408
        %v719 = vunpack.c.0.s8 %v718
        %v720 = vlaneseq
        %v721 = vshrl.u32 %v720, 7
        %v722 = vsub.s32 %v719, %v721
        %v723 = vrot.slane %v709, %v722
        %v724 = vcombine.high %v716, 0
        %v725 = vcombine.high %v723, 0
        %v726 = vcombine.low %v480, %v496
        %v728 = vunpack.c.l.s4 1983009808
        %v729 = vunpack.c.0.s8 %v728
        %v730 = vlaneseq
        %v731 = vshrl.u32 %v730, 7
        %v732 = vsub.s32 %v729, %v731
        %v733 = vrot.slane %v726, %v732
        %v734 = vcombine.low %v488, %v504
        %v736 = vunpack.c.l.s4 1983009808
        %v737 = vunpack.c.0.s8 %v736
        %v738 = vlaneseq
        %v739 = vshrl.u32 %v738, 7
        %v740 = vsub.s32 %v737, %v739
        %v741 = vrot.slane %v734, %v740
        %v742 = vcombine.low %v733, %v741
        %v743 = vcombine.high %v733, %v741
        %v745 = vunpack.c.l.s4 1934713408
        %v746 = vunpack.c.0.s8 %v745
        %v747 = vlaneseq
        %v748 = vshrl.u32 %v747, 7
        %v749 = vsub.s32 %v746, %v748
        %v750 = vrot.slane %v742, %v749
        %v752 = vunpack.c.l.s4 1934713408
        %v753 = vunpack.c.0.s8 %v752
        %v754 = vlaneseq
        %v755 = vshrl.u32 %v754, 7
        %v756 = vsub.s32 %v753, %v755
        %v757 = vrot.slane %v743, %v756
        %v758 = vcombine.high %v750, 0
        %v759 = vcombine.high %v757, 0
        %v760 = vcombine.low %v484, %v500
        %v762 = vunpack.c.l.s4 1983009808
        %v763 = vunpack.c.0.s8 %v762
        %v764 = vlaneseq
        %v765 = vshrl.u32 %v764, 7
        %v766 = vsub.s32 %v763, %v765
        %v767 = vrot.slane %v760, %v766
        %v768 = vcombine.low %v492, %v508
        %v770 = vunpack.c.l.s4 1983009808
        %v771 = vunpack.c.0.s8 %v770
        %v772 = vlaneseq
        %v773 = vshrl.u32 %v772, 7
        %v774 = vsub.s32 %v771, %v773
        %v775 = vrot.slane %v768, %v774
        %v776 = vcombine.low %v767, %v775
        %v777 = vcombine.high %v767, %v775
        %v779 = vunpack.c.l.s4 1934713408
        %v780 = vunpack.c.0.s8 %v779
        %v781 = vlaneseq
        %v782 = vshrl.u32 %v781, 7
        %v783 = vsub.s32 %v780, %v782
        %v784 = vrot.slane %v776, %v783
        %v786 = vunpack.c.l.s4 1934713408
        %v787 = vunpack.c.0.s8 %v786
        %v788 = vlaneseq
        %v789 = vshrl.u32 %v788, 7
        %v790 = vsub.s32 %v787, %v789
        %v791 = vrot.slane %v777, %v790
        %v792 = vcombine.high %v784, 0
        %v793 = vcombine.high %v791, 0
        %v796 = vunpack.c.l.s4 1983009808
        %v797 = vunpack.c.0.s8 %v796
        %v798 = vlaneseq
        %v799 = vshrl.u32 %v798, 7
        %v800 = vsub.s32 %v797, %v799
        %v801 = vrot.slane %v512, %v800
        %v804 = vunpack.c.l.s4 1983009808
        %v805 = vunpack.c.0.s8 %v804
        %v806 = vlaneseq
        %v807 = vshrl.u32 %v806, 7
        %v808 = vsub.s32 %v805, %v807
        %v809 = vrot.slane %v518, %v808
        %v810 = vcombine.low %v801, %v809
        %v811 = vcombine.high %v801, %v809
        %v813 = vunpack.c.l.s4 1934713408
        %v814 = vunpack.c.0.s8 %v813
        %v815 = vlaneseq
        %v816 = vshrl.u32 %v815, 7
        %v817 = vsub.s32 %v814, %v816
        %v818 = vrot.slane %v810, %v817
        %v820 = vunpack.c.l.s4 1934713408
        %v821 = vunpack.c.0.s8 %v820
        %v822 = vlaneseq
        %v823 = vshrl.u32 %v822, 7
        %v824 = vsub.s32 %v821, %v823
        %v825 = vrot.slane %v811, %v824
        %v826 = vcombine.high %v818, 0
        %v827 = vcombine.high %v825, 0
        %v830 = vunpack.c.l.s4 1983009808
        %v831 = vunpack.c.0.s8 %v830
        %v832 = vlaneseq
        %v833 = vshrl.u32 %v832, 7
        %v834 = vsub.s32 %v831, %v833
        %v835 = vrot.slane %v515, %v834
        %v838 = vunpack.c.l.s4 1983009808
        %v839 = vunpack.c.0.s8 %v838
        %v840 = vlaneseq
        %v841 = vshrl.u32 %v840, 7
        %v842 = vsub.s32 %v839, %v841
        %v843 = vrot.slane %v521, %v842
        %v844 = vcombine.low %v835, %v843
        %v845 = vcombine.high %v835, %v843
        %v847 = vunpack.c.l.s4 1934713408
        %v848 = vunpack.c.0.s8 %v847
        %v849 = vlaneseq
        %v850 = vshrl.u32 %v849, 7
        %v851 = vsub.s32 %v848, %v850
        %v852 = vrot.slane %v844, %v851
        %v854 = vunpack.c.l.s4 1934713408
        %v855 = vunpack.c.0.s8 %v854
        %v856 = vlaneseq
        %v857 = vshrl.u32 %v856, 7
        %v858 = vsub.s32 %v855, %v857
        %v859 = vrot.slane %v845, %v858
        %v860 = vcombine.high %v852, 0
        %v861 = vcombine.high %v859, 0
        %v867 = vunpack.c.l.b16 %v546
        %v868 = vunpack.c.l.b16 %v614
        %v869 = vunpack.c.l.b16 %v682
        %v870 = vunpack.c.l.b16 %v750
        %v871 = vunpack.c.l.b16 %v818
        %v872 = vpack.c.b16 %v868, %v867
        %v873 = vpack.c.b16 %v870, %v869
        %v874 = vpack.c.b16 %v871, %v871
        %v880 = vunpack.c.l.b16 %v580
        %v881 = vunpack.c.l.b16 %v648
        %v882 = vunpack.c.l.b16 %v716
        %v883 = vunpack.c.l.b16 %v784
        %v884 = vunpack.c.l.b16 %v852
        %v885 = vpack.c.b16 %v881, %v880
        %v886 = vpack.c.b16 %v883, %v882
        %v887 = vpack.c.b16 %v884, %v884
        %888 = vrot.lane.b32.xlu0 %v885, 8
        %v889 = vpop.permute.xlu0 %888
        %890 = vrot.lane.b32.xlu0 %v886, 8
        %v891 = vpop.permute.xlu0 %890
        %892 = vrot.lane.b32.xlu0 %v887, 8
        %v893 = vpop.permute.xlu0 %892
        %v899 = vunpack.c.l.b16 %v554
        %v900 = vunpack.c.l.b16 %v622
        %v901 = vunpack.c.l.b16 %v690
        %v902 = vunpack.c.l.b16 %v758
        %v903 = vunpack.c.l.b16 %v826
        %v904 = vpack.c.b16 %v900, %v899
        %v905 = vpack.c.b16 %v902, %v901
        %v906 = vpack.c.b16 %v903, %v903
        %907 = vrot.lane.b32.xlu0 %v904, 16
        %v908 = vpop.permute.xlu0 %907
        %909 = vrot.lane.b32.xlu0 %v905, 16
        %v910 = vpop.permute.xlu0 %909
        %911 = vrot.lane.b32.xlu0 %v906, 16
        %v912 = vpop.permute.xlu0 %911
        %v918 = vunpack.c.l.b16 %v588
        %v919 = vunpack.c.l.b16 %v656
        %v920 = vunpack.c.l.b16 %v724
        %v921 = vunpack.c.l.b16 %v792
        %v922 = vunpack.c.l.b16 %v860
        %v923 = vpack.c.b16 %v919, %v918
        %v924 = vpack.c.b16 %v921, %v920
        %v925 = vpack.c.b16 %v922, %v922
        %926 = vrot.lane.b32.xlu0 %v923, 24
        %v927 = vpop.permute.xlu0 %926
        %928 = vrot.lane.b32.xlu0 %v924, 24
        %v929 = vpop.permute.xlu0 %928
        %930 = vrot.lane.b32.xlu0 %v925, 24
        %v931 = vpop.permute.xlu0 %930
        %v937 = vunpack.c.l.b16 %v553
        %v938 = vunpack.c.l.b16 %v621
        %v939 = vunpack.c.l.b16 %v689
        %v940 = vunpack.c.l.b16 %v757
        %v941 = vunpack.c.l.b16 %v825
        %v942 = vpack.c.b16 %v938, %v937
        %v943 = vpack.c.b16 %v940, %v939
        %v944 = vpack.c.b16 %v941, %v941
        %945 = vrot.lane.b32.xlu0 %v942, 32
        %v946 = vpop.permute.xlu0 %945
        %947 = vrot.lane.b32.xlu0 %v943, 32
        %v948 = vpop.permute.xlu0 %947
        %949 = vrot.lane.b32.xlu0 %v944, 32
        %v950 = vpop.permute.xlu0 %949
        %v956 = vunpack.c.l.b16 %v587
        %v957 = vunpack.c.l.b16 %v655
        %v958 = vunpack.c.l.b16 %v723
        %v959 = vunpack.c.l.b16 %v791
        %v960 = vunpack.c.l.b16 %v859
        %v961 = vpack.c.b16 %v957, %v956
        %v962 = vpack.c.b16 %v959, %v958
        %v963 = vpack.c.b16 %v960, %v960
        %964 = vrot.lane.b32.xlu0 %v961, 40
        %v965 = vpop.permute.xlu0 %964
        %966 = vrot.lane.b32.xlu0 %v962, 40
        %v967 = vpop.permute.xlu0 %966
        %968 = vrot.lane.b32.xlu0 %v963, 40
        %v969 = vpop.permute.xlu0 %968
        %v975 = vunpack.c.l.b16 %v555
        %v976 = vunpack.c.l.b16 %v623
        %v977 = vunpack.c.l.b16 %v691
        %v978 = vunpack.c.l.b16 %v759
        %v979 = vunpack.c.l.b16 %v827
        %v980 = vpack.c.b16 %v976, %v975
        %v981 = vpack.c.b16 %v978, %v977
        %v982 = vpack.c.b16 %v979, %v979
        %983 = vrot.lane.b32.xlu0 %v980, 48
        %v984 = vpop.permute.xlu0 %983
        %985 = vrot.lane.b32.xlu0 %v981, 48
        %v986 = vpop.permute.xlu0 %985
        %987 = vrot.lane.b32.xlu0 %v982, 48
        %v988 = vpop.permute.xlu0 %987
        %v994 = vunpack.c.l.b16 %v589
        %v995 = vunpack.c.l.b16 %v657
        %v996 = vunpack.c.l.b16 %v725
        %v997 = vunpack.c.l.b16 %v793
        %v998 = vunpack.c.l.b16 %v861
        %v999 = vpack.c.b16 %v995, %v994
        %v1000 = vpack.c.b16 %v997, %v996
        %v1001 = vpack.c.b16 %v998, %v998
        %1002 = vrot.lane.b32.xlu0 %v999, 56
        %v1003 = vpop.permute.xlu0 %1002
        %1004 = vrot.lane.b32.xlu0 %v1000, 56
        %v1005 = vpop.permute.xlu0 %1004
        %1006 = vrot.lane.b32.xlu0 %v1001, 56
        %v1007 = vpop.permute.xlu0 %1006
        %vm1008 = vcmask 64512
        %v1011 = vsel %vm1008, %v872, %v889
        %v1014 = vsel %vm1008, %v873, %v891
        %v1017 = vsel %vm1008, %v874, %v893
        %vm1018 = vcmask 130048
        %v1020 = vsel %vm1018, %v1011, %v908
        %v1022 = vsel %vm1018, %v1014, %v910
        %v1024 = vsel %vm1018, %v1017, %v912
        %vm1025 = vcmask 195584
        %v1027 = vsel %vm1025, %v1020, %v927
        %v1029 = vsel %vm1025, %v1022, %v929
        %v1031 = vsel %vm1025, %v1024, %v931
        %vm1032 = vcmask 261120
        %v1034 = vsel %vm1032, %v1027, %v946
        %v1036 = vsel %vm1032, %v1029, %v948
        %v1038 = vsel %vm1032, %v1031, %v950
        %vm1039 = vcmask 326656
        %v1041 = vsel %vm1039, %v1034, %v965
        %v1043 = vsel %vm1039, %v1036, %v967
        %v1045 = vsel %vm1039, %v1038, %v969
        %vm1046 = vcmask 392192
        %v1048 = vsel %vm1046, %v1041, %v984
        %v1050 = vsel %vm1046, %v1043, %v986
        %v1052 = vsel %vm1046, %v1045, %v988
        %vm1053 = vcmask 457728
        %v1055 = vsel %vm1053, %v1048, %v1003
        %v1058 = vsel %vm1053, %v1050, %v1005
        %v1061 = vsel %vm1053, %v1052, %v1007
        %v1062 = vld [vmem:[%s1] sm:$0xf]
        %v1063 = vld [vmem:[%s2] sm:$0xff]
        %1065 = vset.pattern.permute.xlu0 0
        %1066 = vperm.xlu0 %1065, %v1063
        %v1067 = vpop.permute.xlu0 %1066
        %vm1069 = vcmask 293888
        %v1071 = vsel %vm1069, %v1062, 0
        %vm1073 = vcmask 1041408
        %v1074 = vsel %vm1073, %v1061, 0
        %1076 = vmatprep.subr.bf16.mxu0 0
        %1077 = vmatpush1.bf16.msra.mxu0 0
        %1078 = vmatprep.subr.bf16.mxu0 0
        %1079 = vmatpush1.bf16.msra.mxu0 0
        %1080 = vmatprep.subr.bf16.mxu0 0
        %1081 = vmatpush1.bf16.msra.mxu0 0
        %1082 = vmatprep.subr.bf16.mxu0 0
        %1083 = vmatpush1.bf16.msra.mxu0 0
        %1084 = vmatprep.subr.bf16.mxu0 0
        %1085 = vmatpush1.bf16.msra.mxu0 0
        %1086 = vmatprep.subr.bf16.mxu0 0
        %1087 = vmatpush1.bf16.msra.mxu0 %v1074
        %1088 = vmatprep.subr.bf16.mxu0 0
        %1089 = vmatpush1.bf16.msra.mxu0 %v1058
        %1090 = vmatprep.subr.bf16.mxu0 0
        %1091 = vmatpush1.bf16.msra.mxu0 %v1055
        %1092 = vmatprep.subr.bf16.mxu0 0
        %1093 = vmatpush2.bf16.msra.mxu0 0
        %1094 = vmatprep.subr.bf16.mxu0 0
        %1095 = vmatpush2.bf16.msra.mxu0 0
        %1096 = vmatprep.subr.bf16.mxu0 0
        %1097 = vmatpush2.bf16.msra.mxu0 0
        %1098 = vmatprep.subr.bf16.mxu0 0
        %1099 = vmatpush2.bf16.msra.mxu0 0
        %1100 = vmatprep.subr.bf16.mxu0 0
        %1101 = vmatpush2.bf16.msra.mxu0 0
        %1102 = vmatprep.subr.bf16.mxu0 0
        %1103 = vmatpush2.bf16.msra.mxu0 0
        %1104 = vmatprep.subr.bf16.mxu0 0
        %1105 = vmatpush2.bf16.msra.mxu0 0
        %1106 = vmatprep.subr.bf16.mxu0 0
        %1107 = vmatpush2.bf16.msra.mxu0 0
        %1108 = vmatprep.mubr.bf16.mxu0 0
        %1109 = vmatmul.mubr.bf16.gmra.mxu0 %v1071
        %v1110 = vpop.f32.mrf.mxu0
        %v1111 = vadd.f32 %v1067, %v1110
        %v1112 = vpop.f32.mrf.mxu0
        %v1113 = vpop.f32.mrf.mxu0
        %v1114 = vpop.f32.mrf.mxu0
        %1115 = vdwg.mxu0
        %v1116 = vmul.f32 %v1111, 0.2
        %v1117 = vmax.f32 %v1111, %v1116
        %vm1118 = vcmask 73728
        %vm1119 = vsmask.f32 256
        %vm1120 = vmand %vm1118, %vm1119
        %v1121 = vld [vmem:[#allocation2] sm:$0x1]
        %v1122 = vsel %vm1120, 0, %v1121
        %1123 = vst [vmem:[#allocation2] sm:$0x1] %v1122
        %v1124 = vld [vmem:[#allocation2 + $0x8] sm:$0x1]
        %v1125 = vsel %vm1120, 0, %v1124
        %1126 = vst [vmem:[#allocation2 + $0x8] sm:$0x1] %v1125
        %v1127 = vld [vmem:[#allocation2 + $0x10] sm:$0x1]
        %v1128 = vsel %vm1120, 0, %v1127
        %1129 = vst [vmem:[#allocation2 + $0x10] sm:$0x1] %v1128
        %v1130 = vld [vmem:[#allocation2 + $0x18] sm:$0x1]
        %v1131 = vsel %vm1120, 0, %v1130
        %1132 = vst [vmem:[#allocation2 + $0x18] sm:$0x1] %v1131
        %v1133 = vld [vmem:[#allocation2 + $0x20] sm:$0x1]
        %v1134 = vsel %vm1120, 0, %v1133
        %1135 = vst [vmem:[#allocation2 + $0x20] sm:$0x1] %v1134
        %v1136 = vld [vmem:[#allocation2 + $0x28] sm:$0x1]
        %v1137 = vsel %vm1120, 0, %v1136
        %1138 = vst [vmem:[#allocation2 + $0x28] sm:$0x1] %v1137
        %v1139 = vld [vmem:[#allocation2 + $0x30] sm:$0x1]
        %v1140 = vsel %vm1120, 0, %v1139
        %1141 = vst [vmem:[#allocation2 + $0x30] sm:$0x1] %v1140
        %v1142 = vld [vmem:[#allocation2 + $0x38] sm:$0x1]
        %v1143 = vsel %vm1120, 0, %v1142
        %1144 = vst [vmem:[#allocation2 + $0x38] sm:$0x1] %v1143
        %vm1145 = vsmask.f32 7938
        %vm1146 = vmand %vm1118, %vm1145
        %v1147 = vld [vmem:[#allocation2 + $0x4] sm:$0x1]
        %v1148 = vsel %vm1146, 0, %v1147
        %1149 = vst [vmem:[#allocation2 + $0x4] sm:$0x1] %v1148
        %v1150 = vld [vmem:[#allocation2 + $0xc] sm:$0x1]
        %v1151 = vsel %vm1146, 0, %v1150
        %1152 = vst [vmem:[#allocation2 + $0xc] sm:$0x1] %v1151
        %v1153 = vld [vmem:[#allocation2 + $0x14] sm:$0x1]
        %v1154 = vsel %vm1146, 0, %v1153
        %1155 = vst [vmem:[#allocation2 + $0x14] sm:$0x1] %v1154
        %v1156 = vld [vmem:[#allocation2 + $0x1c] sm:$0x1]
        %v1157 = vsel %vm1146, 0, %v1156
        %1158 = vst [vmem:[#allocation2 + $0x1c] sm:$0x1] %v1157
        %v1159 = vld [vmem:[#allocation2 + $0x24] sm:$0x1]
        %v1160 = vsel %vm1146, 0, %v1159
        %1161 = vst [vmem:[#allocation2 + $0x24] sm:$0x1] %v1160
        %v1162 = vld [vmem:[#allocation2 + $0x2c] sm:$0x1]
        %v1163 = vsel %vm1146, 0, %v1162
        %1164 = vst [vmem:[#allocation2 + $0x2c] sm:$0x1] %v1163
        %v1165 = vld [vmem:[#allocation2 + $0x34] sm:$0x1]
        %v1166 = vsel %vm1146, 0, %v1165
        %1167 = vst [vmem:[#allocation2 + $0x34] sm:$0x1] %v1166
        %v1168 = vld [vmem:[#allocation2 + $0x3c] sm:$0x1]
        %v1169 = vsel %vm1146, 0, %v1168
        %1170 = vst [vmem:[#allocation2 + $0x3c] sm:$0x1] %v1169
        %vm1171 = vcmask 3072
        %vm1172 = vmand %vm1171, %vm1145
        %v1173 = vld [vmem:[#allocation2] sm:$0xf]
        %v1174 = vsel %vm1172, 0, %v1173
        %1175 = vst [vmem:[#allocation2] sm:$0xf] %v1174
        %vm1176 = vcmask 0
        %vm1177 = vmand %vm1176, %vm1119
        %v1178 = vld [vmem:[#allocation2 + $0x4] sm:$0x1]
        %v1179 = vsel %vm1177, 0, %v1178
        %1180 = vst [vmem:[#allocation2 + $0x4] sm:$0x1] %v1179
        %v1181 = vld [vmem:[#allocation2 + $0x8] sm:$0xf]
        %v1182 = vsel %vm1172, 0, %v1181
        %1183 = vst [vmem:[#allocation2 + $0x8] sm:$0xf] %v1182
        %v1184 = vld [vmem:[#allocation2 + $0xc] sm:$0x1]
        %v1185 = vsel %vm1177, 0, %v1184
        %1186 = vst [vmem:[#allocation2 + $0xc] sm:$0x1] %v1185
        %v1187 = vld [vmem:[#allocation2 + $0x10] sm:$0xf]
        %v1188 = vsel %vm1172, 0, %v1187
        %1189 = vst [vmem:[#allocation2 + $0x10] sm:$0xf] %v1188
        %v1190 = vld [vmem:[#allocation2 + $0x14] sm:$0x1]
        %v1191 = vsel %vm1177, 0, %v1190
        %1192 = vst [vmem:[#allocation2 + $0x14] sm:$0x1] %v1191
        %v1193 = vld [vmem:[#allocation2 + $0x18] sm:$0xf]
        %v1194 = vsel %vm1172, 0, %v1193
        %1195 = vst [vmem:[#allocation2 + $0x18] sm:$0xf] %v1194
        %v1196 = vld [vmem:[#allocation2 + $0x1c] sm:$0x1]
        %v1197 = vsel %vm1177, 0, %v1196
        %1198 = vst [vmem:[#allocation2 + $0x1c] sm:$0x1] %v1197
        %v1199 = vld [vmem:[#allocation2 + $0x20] sm:$0xf]
        %v1200 = vsel %vm1172, 0, %v1199
        %1201 = vst [vmem:[#allocation2 + $0x20] sm:$0xf] %v1200
        %v1202 = vld [vmem:[#allocation2 + $0x24] sm:$0x1]
        %v1203 = vsel %vm1177, 0, %v1202
        %1204 = vst [vmem:[#allocation2 + $0x24] sm:$0x1] %v1203
        %v1205 = vld [vmem:[#allocation2 + $0x28] sm:$0xf]
        %v1206 = vsel %vm1172, 0, %v1205
        %1207 = vst [vmem:[#allocation2 + $0x28] sm:$0xf] %v1206
        %v1208 = vld [vmem:[#allocation2 + $0x2c] sm:$0x1]
        %v1209 = vsel %vm1177, 0, %v1208
        %1210 = vst [vmem:[#allocation2 + $0x2c] sm:$0x1] %v1209
        %v1211 = vld [vmem:[#allocation2 + $0x30] sm:$0xf]
        %v1212 = vsel %vm1172, 0, %v1211
        %1213 = vst [vmem:[#allocation2 + $0x30] sm:$0xf] %v1212
        %v1214 = vld [vmem:[#allocation2 + $0x34] sm:$0x1]
        %v1215 = vsel %vm1177, 0, %v1214
        %1216 = vst [vmem:[#allocation2 + $0x34] sm:$0x1] %v1215
        %v1217 = vld [vmem:[#allocation2 + $0x38] sm:$0xf]
        %v1218 = vsel %vm1172, 0, %v1217
        %1219 = vst [vmem:[#allocation2 + $0x38] sm:$0xf] %v1218
        %v1220 = vld [vmem:[#allocation2 + $0x3c] sm:$0x1]
        %v1221 = vsel %vm1177, 0, %v1220
        %1222 = vst [vmem:[#allocation2 + $0x3c] sm:$0x1] %v1221
        %vm1223 = vcmask 76872
        %vm1224 = vmand %vm1223, %vm1145
        %v1225 = vld [vmem:[#allocation2] sm:$0xf]
        %v1226 = vsel %vm1224, 0, %v1225
        %1227 = vst [vmem:[#allocation2] sm:$0xf] %v1226
        %vm1228 = vcmask 73800
        %vm1229 = vmand %vm1228, %vm1119
        %v1230 = vld [vmem:[#allocation2 + $0x4] sm:$0x1]
        %v1231 = vsel %vm1229, 0, %v1230
        %1232 = vst [vmem:[#allocation2 + $0x4] sm:$0x1] %v1231
        %v1233 = vld [vmem:[#allocation2 + $0x8] sm:$0xf]
        %v1234 = vsel %vm1224, 0, %v1233
        %1235 = vst [vmem:[#allocation2 + $0x8] sm:$0xf] %v1234
        %v1236 = vld [vmem:[#allocation2 + $0xc] sm:$0x1]
        %v1237 = vsel %vm1229, 0, %v1236
        %1238 = vst [vmem:[#allocation2 + $0xc] sm:$0x1] %v1237
        %v1239 = vld [vmem:[#allocation2 + $0x10] sm:$0xf]
        %v1240 = vsel %vm1224, 0, %v1239
        %1241 = vst [vmem:[#allocation2 + $0x10] sm:$0xf] %v1240
        %v1242 = vld [vmem:[#allocation2 + $0x14] sm:$0x1]
        %v1243 = vsel %vm1229, 0, %v1242
        %1244 = vst [vmem:[#allocation2 + $0x14] sm:$0x1] %v1243
        %v1245 = vld [vmem:[#allocation2 + $0x18] sm:$0xf]
        %v1246 = vsel %vm1224, 0, %v1245
        %1247 = vst [vmem:[#allocation2 + $0x18] sm:$0xf] %v1246
        %v1248 = vld [vmem:[#allocation2 + $0x1c] sm:$0x1]
        %v1249 = vsel %vm1229, 0, %v1248
        %1250 = vst [vmem:[#allocation2 + $0x1c] sm:$0x1] %v1249
        %v1251 = vld [vmem:[#allocation2 + $0x20] sm:$0xf]
        %v1252 = vsel %vm1224, 0, %v1251
        %1253 = vst [vmem:[#allocation2 + $0x20] sm:$0xf] %v1252
        %v1254 = vld [vmem:[#allocation2 + $0x24] sm:$0x1]
        %v1255 = vsel %vm1229, 0, %v1254
        %1256 = vst [vmem:[#allocation2 + $0x24] sm:$0x1] %v1255
        %v1257 = vld [vmem:[#allocation2 + $0x28] sm:$0xf]
        %v1258 = vsel %vm1224, 0, %v1257
        %1259 = vst [vmem:[#allocation2 + $0x28] sm:$0xf] %v1258
        %v1260 = vld [vmem:[#allocation2 + $0x2c] sm:$0x1]
        %v1261 = vsel %vm1229, 0, %v1260
        %1262 = vst [vmem:[#allocation2 + $0x2c] sm:$0x1] %v1261
        %v1263 = vld [vmem:[#allocation2 + $0x30] sm:$0xf]
        %v1264 = vsel %vm1224, 0, %v1263
        %1265 = vst [vmem:[#allocation2 + $0x30] sm:$0xf] %v1264
        %v1266 = vld [vmem:[#allocation2 + $0x34] sm:$0x1]
        %v1267 = vsel %vm1229, 0, %v1266
        %1268 = vst [vmem:[#allocation2 + $0x34] sm:$0x1] %v1267
        %v1269 = vld [vmem:[#allocation2 + $0x38] sm:$0xf]
        %v1270 = vsel %vm1224, 0, %v1269
        %1271 = vst [vmem:[#allocation2 + $0x38] sm:$0xf] %v1270
        %v1272 = vld [vmem:[#allocation2 + $0x3c] sm:$0x1]
        %v1273 = vsel %vm1229, 0, %v1272
        %1274 = vst [vmem:[#allocation2 + $0x3c] sm:$0x1] %v1273
        %v1275 = vpack.c.bf16 %v1117, %v1117
        %1277 = vrot.lane.b32.xlu0 %v1275, 120
        %v1278 = vpop.permute.xlu0 %1277
        %1280 = vrot.lane.b32.xlu0 %v1275, 112
        %v1281 = vpop.permute.xlu0 %1280
        %1283 = vrot.lane.b32.xlu0 %v1275, 104
        %v1284 = vpop.permute.xlu0 %1283
        %1286 = vrot.lane.b32.xlu0 %v1275, 96
        %v1287 = vpop.permute.xlu0 %1286
        %1289 = vrot.lane.b32.xlu0 %v1275, 88
        %v1290 = vpop.permute.xlu0 %1289
        %1292 = vrot.lane.b32.xlu0 %v1275, 80
        %v1293 = vpop.permute.xlu0 %1292
        %1295 = vrot.lane.b32.xlu0 %v1275, 72
        %v1296 = vpop.permute.xlu0 %1295
        %v1298 = vcombine.low %v1275, %v1287
        %v1300 = vunpack.c.l.s4 1983009808
        %v1301 = vunpack.c.0.s8 %v1300
        %v1302 = vlaneseq
        %v1303 = vshrl.u32 %v1302, 7
        %v1304 = vsub.s32 %v1301, %v1303
        %v1305 = vrot.slane %v1298, %v1304
        %v1306 = vcombine.low %v1281, %v1293
        %v1308 = vunpack.c.l.s4 1983009808
        %v1309 = vunpack.c.0.s8 %v1308
        %v1310 = vlaneseq
        %v1311 = vshrl.u32 %v1310, 7
        %v1312 = vsub.s32 %v1309, %v1311
        %v1313 = vrot.slane %v1306, %v1312
        %v1314 = vcombine.low %v1305, %v1313
        %v1315 = vcombine.high %v1305, %v1313
        %v1317 = vunpack.c.l.s4 1934713408
        %v1318 = vunpack.c.0.s8 %v1317
        %v1319 = vlaneseq
        %v1320 = vshrl.u32 %v1319, 7
        %v1321 = vsub.s32 %v1318, %v1320
        %v1322 = vrot.slane %v1314, %v1321
        %v1324 = vunpack.c.l.s4 1934713408
        %v1325 = vunpack.c.0.s8 %v1324
        %v1326 = vlaneseq
        %v1327 = vshrl.u32 %v1326, 7
        %v1328 = vsub.s32 %v1325, %v1327
        %v1329 = vrot.slane %v1315, %v1328
        %v1330 = vcombine.high %v1322, 0
        %v1331 = vcombine.high %v1329, 0
        %v1332 = vcombine.low %v1278, %v1290
        %v1334 = vunpack.c.l.s4 1983009808
        %v1335 = vunpack.c.0.s8 %v1334
        %v1336 = vlaneseq
        %v1337 = vshrl.u32 %v1336, 7
        %v1338 = vsub.s32 %v1335, %v1337
        %v1339 = vrot.slane %v1332, %v1338
        %v1340 = vcombine.low %v1284, %v1296
        %v1342 = vunpack.c.l.s4 1983009808
        %v1343 = vunpack.c.0.s8 %v1342
        %v1344 = vlaneseq
        %v1345 = vshrl.u32 %v1344, 7
        %v1346 = vsub.s32 %v1343, %v1345
        %v1347 = vrot.slane %v1340, %v1346
        %v1348 = vcombine.low %v1339, %v1347
        %v1349 = vcombine.high %v1339, %v1347
        %v1351 = vunpack.c.l.s4 1934713408
        %v1352 = vunpack.c.0.s8 %v1351
        %v1353 = vlaneseq
        %v1354 = vshrl.u32 %v1353, 7
        %v1355 = vsub.s32 %v1352, %v1354
        %v1356 = vrot.slane %v1348, %v1355
        %v1358 = vunpack.c.l.s4 1934713408
        %v1359 = vunpack.c.0.s8 %v1358
        %v1360 = vlaneseq
        %v1361 = vshrl.u32 %v1360, 7
        %v1362 = vsub.s32 %v1359, %v1361
        %v1363 = vrot.slane %v1349, %v1362
        %v1364 = vcombine.high %v1356, 0
        %v1365 = vcombine.high %v1363, 0
        %v1368 = vpack.i.b16 %v1356, %v1322
        %v1369 = vshrl.u32 %v1322, 16
        %v1370 = vshrl.u32 %v1356, 16
        %v1371 = vpack.i.b16 %v1370, %v1369
        %v1374 = vpack.i.b16 %v1364, %v1330
        %v1375 = vshrl.u32 %v1330, 16
        %v1376 = vshrl.u32 %v1364, 16
        %v1377 = vpack.i.b16 %v1376, %v1375
        %v1380 = vpack.i.b16 %v1363, %v1329
        %v1381 = vshrl.u32 %v1329, 16
        %v1382 = vshrl.u32 %v1363, 16
        %v1383 = vpack.i.b16 %v1382, %v1381
        %v1386 = vpack.i.b16 %v1365, %v1331
        %v1387 = vshrl.u32 %v1331, 16
        %v1388 = vshrl.u32 %v1365, 16
        %v1389 = vpack.i.b16 %v1388, %v1387
        %v1390 = vunpack.c.l.b16 %v1368
        %v1391 = vunpack.c.l.b16 %v1371
        %v1392 = vunpack.c.l.b16 %v1374
        %v1393 = vunpack.c.l.b16 %v1377
        %v1394 = vunpack.c.l.b16 %v1380
        %v1395 = vunpack.c.l.b16 %v1383
        %v1396 = vunpack.c.l.b16 %v1386
        %v1397 = vunpack.c.l.b16 %v1389
        %v1398 = vpack.c.b16 %v1390, %v1390
        %v1399 = vpack.c.b16 %v1391, %v1391
        %v1400 = vpack.c.b16 %v1392, %v1392
        %v1401 = vpack.c.b16 %v1393, %v1393
        %v1402 = vpack.c.b16 %v1394, %v1394
        %v1403 = vpack.c.b16 %v1395, %v1395
        %v1404 = vpack.c.b16 %v1396, %v1396
        %v1405 = vpack.c.b16 %v1397, %v1397
        %v1407 = vshrl.u32 %v1398, 16
        %v1409 = vrot.slane %v1407, 7
        %v1410 = vshll.u32 %v1398, 16
        %v1412 = vor.u32 %v1409, %v1410
        %v1413 = vrot.slane %v1409, 4
        %v1415 = vshrl.u32 %v1399, 16
        %v1417 = vrot.slane %v1415, 7
        %v1418 = vshll.u32 %v1399, 16
        %v1420 = vor.u32 %v1417, %v1418
        %v1421 = vrot.slane %v1417, 4
        %v1423 = vshrl.u32 %v1400, 16
        %v1425 = vrot.slane %v1423, 7
        %v1426 = vshll.u32 %v1400, 16
        %v1428 = vor.u32 %v1425, %v1426
        %v1429 = vrot.slane %v1425, 4
        %v1431 = vshrl.u32 %v1401, 16
        %v1433 = vrot.slane %v1431, 7
        %v1434 = vshll.u32 %v1401, 16
        %v1436 = vor.u32 %v1433, %v1434
        %v1437 = vrot.slane %v1433, 4
        %v1439 = vshrl.u32 %v1402, 16
        %v1441 = vrot.slane %v1439, 7
        %v1442 = vshll.u32 %v1402, 16
        %v1444 = vor.u32 %v1441, %v1442
        %v1445 = vrot.slane %v1441, 4
        %v1447 = vshrl.u32 %v1403, 16
        %v1449 = vrot.slane %v1447, 7
        %v1450 = vshll.u32 %v1403, 16
        %v1452 = vor.u32 %v1449, %v1450
        %v1453 = vrot.slane %v1449, 4
        %v1455 = vshrl.u32 %v1404, 16
        %v1457 = vrot.slane %v1455, 7
        %v1458 = vshll.u32 %v1404, 16
        %v1460 = vor.u32 %v1457, %v1458
        %v1461 = vrot.slane %v1457, 4
        %v1463 = vshrl.u32 %v1405, 16
        %v1465 = vrot.slane %v1463, 7
        %v1466 = vshll.u32 %v1405, 16
        %v1468 = vor.u32 %v1465, %v1466
        %v1469 = vrot.slane %v1465, 4
        %1470 = vrot.lane.b32.xlu0 %v1412, 1
        %v1471 = vpop.permute.xlu0 %1470
        %1472 = vrot.lane.b32.xlu0 %v1413, 1
        %v1473 = vpop.permute.xlu0 %1472
        %1474 = vrot.lane.b32.xlu0 %v1420, 1
        %v1475 = vpop.permute.xlu0 %1474
        %1476 = vrot.lane.b32.xlu0 %v1421, 1
        %v1477 = vpop.permute.xlu0 %1476
        %1478 = vrot.lane.b32.xlu0 %v1428, 1
        %v1479 = vpop.permute.xlu0 %1478
        %1480 = vrot.lane.b32.xlu0 %v1429, 1
        %v1481 = vpop.permute.xlu0 %1480
        %1482 = vrot.lane.b32.xlu0 %v1436, 1
        %v1483 = vpop.permute.xlu0 %1482
        %1484 = vrot.lane.b32.xlu0 %v1437, 1
        %v1485 = vpop.permute.xlu0 %1484
        %1486 = vrot.lane.b32.xlu0 %v1444, 1
        %v1487 = vpop.permute.xlu0 %1486
        %1488 = vrot.lane.b32.xlu0 %v1445, 1
        %v1489 = vpop.permute.xlu0 %1488
        %1490 = vrot.lane.b32.xlu0 %v1452, 1
        %v1491 = vpop.permute.xlu0 %1490
        %1492 = vrot.lane.b32.xlu0 %v1453, 1
        %v1493 = vpop.permute.xlu0 %1492
        %1494 = vrot.lane.b32.xlu0 %v1460, 1
        %v1495 = vpop.permute.xlu0 %1494
        %1496 = vrot.lane.b32.xlu0 %v1461, 1
        %v1497 = vpop.permute.xlu0 %1496
        %1498 = vrot.lane.b32.xlu0 %v1468, 1
        %v1499 = vpop.permute.xlu0 %1498
        %1500 = vrot.lane.b32.xlu0 %v1469, 1
        %v1501 = vpop.permute.xlu0 %1500
        %vm1518 = vcmask 68616
        %vm1519 = vmand %vm1518, %vm1145
        %v1520 = vld [vmem:[#allocation2] sm:$0xf]
        %v1521 = vsel %vm1519, %v1471, %v1520
        %1522 = vst [vmem:[#allocation2] sm:$0xf] %v1521
        %vm1523 = vcmask 65544
        %vm1524 = vmand %vm1523, %vm1119
        %v1525 = vld [vmem:[#allocation2 + $0x4] sm:$0x1]
        %v1526 = vsel %vm1524, %v1473, %v1525
        %1527 = vst [vmem:[#allocation2 + $0x4] sm:$0x1] %v1526
        %v1528 = vld [vmem:[#allocation2 + $0x8] sm:$0xf]
        %v1529 = vsel %vm1519, %v1475, %v1528
        %1530 = vst [vmem:[#allocation2 + $0x8] sm:$0xf] %v1529
        %v1531 = vld [vmem:[#allocation2 + $0xc] sm:$0x1]
        %v1532 = vsel %vm1524, %v1477, %v1531
        %1533 = vst [vmem:[#allocation2 + $0xc] sm:$0x1] %v1532
        %v1534 = vld [vmem:[#allocation2 + $0x10] sm:$0xf]
        %v1535 = vsel %vm1519, %v1479, %v1534
        %1536 = vst [vmem:[#allocation2 + $0x10] sm:$0xf] %v1535
        %v1537 = vld [vmem:[#allocation2 + $0x14] sm:$0x1]
        %v1538 = vsel %vm1524, %v1481, %v1537
        %1539 = vst [vmem:[#allocation2 + $0x14] sm:$0x1] %v1538
        %v1540 = vld [vmem:[#allocation2 + $0x18] sm:$0xf]
        %v1541 = vsel %vm1519, %v1483, %v1540
        %1542 = vst [vmem:[#allocation2 + $0x18] sm:$0xf] %v1541
        %v1543 = vld [vmem:[#allocation2 + $0x1c] sm:$0x1]
        %v1544 = vsel %vm1524, %v1485, %v1543
        %1545 = vst [vmem:[#allocation2 + $0x1c] sm:$0x1] %v1544
        %v1546 = vld [vmem:[#allocation2 + $0x20] sm:$0xf]
        %v1547 = vsel %vm1519, %v1487, %v1546
        %1548 = vst [vmem:[#allocation2 + $0x20] sm:$0xf] %v1547
        %v1549 = vld [vmem:[#allocation2 + $0x24] sm:$0x1]
        %v1550 = vsel %vm1524, %v1489, %v1549
        %1551 = vst [vmem:[#allocation2 + $0x24] sm:$0x1] %v1550
        %v1552 = vld [vmem:[#allocation2 + $0x28] sm:$0xf]
        %v1553 = vsel %vm1519, %v1491, %v1552
        %1554 = vst [vmem:[#allocation2 + $0x28] sm:$0xf] %v1553
        %v1555 = vld [vmem:[#allocation2 + $0x2c] sm:$0x1]
        %v1556 = vsel %vm1524, %v1493, %v1555
        %1557 = vst [vmem:[#allocation2 + $0x2c] sm:$0x1] %v1556
        %v1558 = vld [vmem:[#allocation2 + $0x30] sm:$0xf]
        %v1559 = vsel %vm1519, %v1495, %v1558
        %1560 = vst [vmem:[#allocation2 + $0x30] sm:$0xf] %v1559
        %v1561 = vld [vmem:[#allocation2 + $0x34] sm:$0x1]
        %v1562 = vsel %vm1524, %v1497, %v1561
        %1563 = vst [vmem:[#allocation2 + $0x34] sm:$0x1] %v1562
        %v1564 = vld [vmem:[#allocation2 + $0x38] sm:$0xf]
        %v1565 = vsel %vm1519, %v1499, %v1564
        %1566 = vst [vmem:[#allocation2 + $0x38] sm:$0xf] %v1565
        %v1567 = vld [vmem:[#allocation2 + $0x3c] sm:$0x1]
        %v1568 = vsel %vm1524, %v1501, %v1567
        %1569 = vst [vmem:[#allocation2 + $0x3c] sm:$0x1] %v1568
        %v1570 = vld [vmem:[#allocation2] sm:$0xf]
        %v1571 = vld [vmem:[#allocation2 + $0x8] sm:$0xf]
        %v1572 = vld [vmem:[#allocation2 + $0x10] sm:$0xf]
        %v1573 = vld [vmem:[#allocation2 + $0x18] sm:$0xf]
        %v1574 = vld [vmem:[#allocation2 + $0x20] sm:$0xf]
        %v1575 = vld [vmem:[#allocation2 + $0x28] sm:$0xf]
        %v1576 = vld [vmem:[#allocation2 + $0x30] sm:$0xf]
        %v1577 = vld [vmem:[#allocation2 + $0x38] sm:$0xf]
        %v1578 = vld [vmem:[#allocation2 + $0x4] sm:$0x1]
        %v1579 = vld [vmem:[#allocation2 + $0xc] sm:$0x1]
        %v1580 = vld [vmem:[#allocation2 + $0x14] sm:$0x1]
        %v1581 = vld [vmem:[#allocation2 + $0x1c] sm:$0x1]
        %v1582 = vld [vmem:[#allocation2 + $0x24] sm:$0x1]
        %v1583 = vld [vmem:[#allocation2 + $0x2c] sm:$0x1]
        %v1584 = vld [vmem:[#allocation2 + $0x34] sm:$0x1]
        %v1585 = vld [vmem:[#allocation2 + $0x3c] sm:$0x1]
        %v1586 = vld [vmem:[#allocation2] sm:$0xe]
        %v1587 = vld [vmem:[#allocation2 + $0x8] sm:$0xe]
        %v1588 = vld [vmem:[#allocation2 + $0x10] sm:$0xe]
        %v1589 = vld [vmem:[#allocation2 + $0x18] sm:$0xe]
        %v1590 = vld [vmem:[#allocation2 + $0x20] sm:$0xe]
        %v1591 = vld [vmem:[#allocation2 + $0x28] sm:$0xe]
        %v1592 = vld [vmem:[#allocation2 + $0x30] sm:$0xe]
        %v1593 = vld [vmem:[#allocation2 + $0x38] sm:$0xe]
        %1602 = vrot.lane.b32.xlu0 %v1570, 127
        %v1603 = vpop.permute.xlu0 %1602
        %1604 = vrot.lane.b32.xlu0 %v1571, 127
        %v1605 = vpop.permute.xlu0 %1604
        %1606 = vrot.lane.b32.xlu0 %v1572, 127
        %v1607 = vpop.permute.xlu0 %1606
        %1608 = vrot.lane.b32.xlu0 %v1573, 127
        %v1609 = vpop.permute.xlu0 %1608
        %1610 = vrot.lane.b32.xlu0 %v1574, 127
        %v1611 = vpop.permute.xlu0 %1610
        %1612 = vrot.lane.b32.xlu0 %v1575, 127
        %v1613 = vpop.permute.xlu0 %1612
        %1614 = vrot.lane.b32.xlu0 %v1576, 127
        %v1615 = vpop.permute.xlu0 %1614
        %1616 = vrot.lane.b32.xlu0 %v1577, 127
        %v1617 = vpop.permute.xlu0 %1616
        %1626 = vrot.lane.b32.xlu0 %v1570, 126
        %v1627 = vpop.permute.xlu0 %1626
        %1628 = vrot.lane.b32.xlu0 %v1571, 126
        %v1629 = vpop.permute.xlu0 %1628
        %1630 = vrot.lane.b32.xlu0 %v1572, 126
        %v1631 = vpop.permute.xlu0 %1630
        %1632 = vrot.lane.b32.xlu0 %v1573, 126
        %v1633 = vpop.permute.xlu0 %1632
        %1634 = vrot.lane.b32.xlu0 %v1574, 126
        %v1635 = vpop.permute.xlu0 %1634
        %1636 = vrot.lane.b32.xlu0 %v1575, 126
        %v1637 = vpop.permute.xlu0 %1636
        %1638 = vrot.lane.b32.xlu0 %v1576, 126
        %v1639 = vpop.permute.xlu0 %1638
        %1640 = vrot.lane.b32.xlu0 %v1577, 126
        %v1641 = vpop.permute.xlu0 %1640
        %v1651 = vshrl.u32 %v1570, 16
        %v1653 = vrot.slane %v1651, 4
        %v1654 = vshll.u32 %v1570, 16
        %v1656 = vrot.slane %v1654, 5
        %v1657 = vor.u32 %v1653, %v1656
        %v1658 = vrot.slane %v1657, 4
        %v1660 = vshll.u32 %v1578, 16
        %v1662 = vrot.slane %v1660, 5
        %v1663 = vsel %vm277, %v1658, %v1662
        %v1665 = vshrl.u32 %v1571, 16
        %v1667 = vrot.slane %v1665, 4
        %v1668 = vshll.u32 %v1571, 16
        %v1670 = vrot.slane %v1668, 5
        %v1671 = vor.u32 %v1667, %v1670
        %v1672 = vrot.slane %v1671, 4
        %v1674 = vshll.u32 %v1579, 16
        %v1676 = vrot.slane %v1674, 5
        %v1677 = vsel %vm277, %v1672, %v1676
        %v1679 = vshrl.u32 %v1572, 16
        %v1681 = vrot.slane %v1679, 4
        %v1682 = vshll.u32 %v1572, 16
        %v1684 = vrot.slane %v1682, 5
        %v1685 = vor.u32 %v1681, %v1684
        %v1686 = vrot.slane %v1685, 4
        %v1688 = vshll.u32 %v1580, 16
        %v1690 = vrot.slane %v1688, 5
        %v1691 = vsel %vm277, %v1686, %v1690
        %v1693 = vshrl.u32 %v1573, 16
        %v1695 = vrot.slane %v1693, 4
        %v1696 = vshll.u32 %v1573, 16
        %v1698 = vrot.slane %v1696, 5
        %v1699 = vor.u32 %v1695, %v1698
        %v1700 = vrot.slane %v1699, 4
        %v1702 = vshll.u32 %v1581, 16
        %v1704 = vrot.slane %v1702, 5
        %v1705 = vsel %vm277, %v1700, %v1704
        %v1707 = vshrl.u32 %v1574, 16
        %v1709 = vrot.slane %v1707, 4
        %v1710 = vshll.u32 %v1574, 16
        %v1712 = vrot.slane %v1710, 5
        %v1713 = vor.u32 %v1709, %v1712
        %v1714 = vrot.slane %v1713, 4
        %v1716 = vshll.u32 %v1582, 16
        %v1718 = vrot.slane %v1716, 5
        %v1719 = vsel %vm277, %v1714, %v1718
        %v1721 = vshrl.u32 %v1575, 16
        %v1723 = vrot.slane %v1721, 4
        %v1724 = vshll.u32 %v1575, 16
        %v1726 = vrot.slane %v1724, 5
        %v1727 = vor.u32 %v1723, %v1726
        %v1728 = vrot.slane %v1727, 4
        %v1730 = vshll.u32 %v1583, 16
        %v1732 = vrot.slane %v1730, 5
        %v1733 = vsel %vm277, %v1728, %v1732
        %v1735 = vshrl.u32 %v1576, 16
        %v1737 = vrot.slane %v1735, 4
        %v1738 = vshll.u32 %v1576, 16
        %v1740 = vrot.slane %v1738, 5
        %v1741 = vor.u32 %v1737, %v1740
        %v1742 = vrot.slane %v1741, 4
        %v1744 = vshll.u32 %v1584, 16
        %v1746 = vrot.slane %v1744, 5
        %v1747 = vsel %vm277, %v1742, %v1746
        %v1749 = vshrl.u32 %v1577, 16
        %v1751 = vrot.slane %v1749, 4
        %v1752 = vshll.u32 %v1577, 16
        %v1754 = vrot.slane %v1752, 5
        %v1755 = vor.u32 %v1751, %v1754
        %v1756 = vrot.slane %v1755, 4
        %v1758 = vshll.u32 %v1585, 16
        %v1760 = vrot.slane %v1758, 5
        %v1761 = vsel %vm277, %v1756, %v1760
        %1770 = vrot.lane.b32.xlu0 %v1663, 127
        %v1771 = vpop.permute.xlu0 %1770
        %1772 = vrot.lane.b32.xlu0 %v1677, 127
        %v1773 = vpop.permute.xlu0 %1772
        %1774 = vrot.lane.b32.xlu0 %v1691, 127
        %v1775 = vpop.permute.xlu0 %1774
        %1776 = vrot.lane.b32.xlu0 %v1705, 127
        %v1777 = vpop.permute.xlu0 %1776
        %1778 = vrot.lane.b32.xlu0 %v1719, 127
        %v1779 = vpop.permute.xlu0 %1778
        %1780 = vrot.lane.b32.xlu0 %v1733, 127
        %v1781 = vpop.permute.xlu0 %1780
        %1782 = vrot.lane.b32.xlu0 %v1747, 127
        %v1783 = vpop.permute.xlu0 %1782
        %1784 = vrot.lane.b32.xlu0 %v1761, 127
        %v1785 = vpop.permute.xlu0 %1784
        %1794 = vrot.lane.b32.xlu0 %v1663, 126
        %v1795 = vpop.permute.xlu0 %1794
        %1796 = vrot.lane.b32.xlu0 %v1677, 126
        %v1797 = vpop.permute.xlu0 %1796
        %1798 = vrot.lane.b32.xlu0 %v1691, 126
        %v1799 = vpop.permute.xlu0 %1798
        %1800 = vrot.lane.b32.xlu0 %v1705, 126
        %v1801 = vpop.permute.xlu0 %1800
        %1802 = vrot.lane.b32.xlu0 %v1719, 126
        %v1803 = vpop.permute.xlu0 %1802
        %1804 = vrot.lane.b32.xlu0 %v1733, 126
        %v1805 = vpop.permute.xlu0 %1804
        %1806 = vrot.lane.b32.xlu0 %v1747, 126
        %v1807 = vpop.permute.xlu0 %1806
        %1808 = vrot.lane.b32.xlu0 %v1761, 126
        %v1809 = vpop.permute.xlu0 %1808
        %vm1834 = vcmask 1042432
        %vm1835 = vcmask 1046532
        %vm1836 = vmor %vm1834, %vm1835
        %v1837 = vrot.slane %v1586, 5
        %v1838 = vrot.slane %v1837, 4
        %v1839 = vrot.slane %v1578, 5
        %v1840 = vsel %vm1836, %v1838, %v1839
        %v1841 = vrot.slane %v1587, 5
        %v1842 = vrot.slane %v1841, 4
        %v1843 = vrot.slane %v1579, 5
        %v1844 = vsel %vm1836, %v1842, %v1843
        %v1845 = vrot.slane %v1588, 5
        %v1846 = vrot.slane %v1845, 4
        %v1847 = vrot.slane %v1580, 5
        %v1848 = vsel %vm1836, %v1846, %v1847
        %v1849 = vrot.slane %v1589, 5
        %v1850 = vrot.slane %v1849, 4
        %v1851 = vrot.slane %v1581, 5
        %v1852 = vsel %vm1836, %v1850, %v1851
        %v1853 = vrot.slane %v1590, 5
        %v1854 = vrot.slane %v1853, 4
        %v1855 = vrot.slane %v1582, 5
        %v1856 = vsel %vm1836, %v1854, %v1855
        %v1857 = vrot.slane %v1591, 5
        %v1858 = vrot.slane %v1857, 4
        %v1859 = vrot.slane %v1583, 5
        %v1860 = vsel %vm1836, %v1858, %v1859
        %v1861 = vrot.slane %v1592, 5
        %v1862 = vrot.slane %v1861, 4
        %v1863 = vrot.slane %v1584, 5
        %v1864 = vsel %vm1836, %v1862, %v1863
        %v1865 = vrot.slane %v1593, 5
        %v1866 = vrot.slane %v1865, 4
        %v1867 = vrot.slane %v1585, 5
        %v1868 = vsel %vm1836, %v1866, %v1867
        %1877 = vrot.lane.b32.xlu0 %v1840, 127
        %v1878 = vpop.permute.xlu0 %1877
        %1879 = vrot.lane.b32.xlu0 %v1844, 127
        %v1880 = vpop.permute.xlu0 %1879
        %1881 = vrot.lane.b32.xlu0 %v1848, 127
        %v1882 = vpop.permute.xlu0 %1881
        %1883 = vrot.lane.b32.xlu0 %v1852, 127
        %v1884 = vpop.permute.xlu0 %1883
        %1885 = vrot.lane.b32.xlu0 %v1856, 127
        %v1886 = vpop.permute.xlu0 %1885
        %1887 = vrot.lane.b32.xlu0 %v1860, 127
        %v1888 = vpop.permute.xlu0 %1887
        %1889 = vrot.lane.b32.xlu0 %v1864, 127
        %v1890 = vpop.permute.xlu0 %1889
        %1891 = vrot.lane.b32.xlu0 %v1868, 127
        %v1892 = vpop.permute.xlu0 %1891
        %1901 = vrot.lane.b32.xlu0 %v1840, 126
        %v1902 = vpop.permute.xlu0 %1901
        %1903 = vrot.lane.b32.xlu0 %v1844, 126
        %v1904 = vpop.permute.xlu0 %1903
        %1905 = vrot.lane.b32.xlu0 %v1848, 126
        %v1906 = vpop.permute.xlu0 %1905
        %1907 = vrot.lane.b32.xlu0 %v1852, 126
        %v1908 = vpop.permute.xlu0 %1907
        %1909 = vrot.lane.b32.xlu0 %v1856, 126
        %v1910 = vpop.permute.xlu0 %1909
        %1911 = vrot.lane.b32.xlu0 %v1860, 126
        %v1912 = vpop.permute.xlu0 %1911
        %1913 = vrot.lane.b32.xlu0 %v1864, 126
        %v1914 = vpop.permute.xlu0 %1913
        %1915 = vrot.lane.b32.xlu0 %v1868, 126
        %v1916 = vpop.permute.xlu0 %1915
        %v1925 = vcombine.low %v1570, %v1574
        %v1927 = vunpack.c.l.s4 1983009808
        %v1928 = vunpack.c.0.s8 %v1927
        %v1929 = vlaneseq
        %v1930 = vshrl.u32 %v1929, 7
        %v1931 = vsub.s32 %v1928, %v1930
        %v1932 = vrot.slane %v1925, %v1931
        %v1933 = vcombine.low %v1572, %v1576
        %v1935 = vunpack.c.l.s4 1983009808
        %v1936 = vunpack.c.0.s8 %v1935
        %v1937 = vlaneseq
        %v1938 = vshrl.u32 %v1937, 7
        %v1939 = vsub.s32 %v1936, %v1938
        %v1940 = vrot.slane %v1933, %v1939
        %v1941 = vcombine.low %v1932, %v1940
        %v1942 = vcombine.high %v1932, %v1940
        %v1944 = vunpack.c.l.s4 1934713408
        %v1945 = vunpack.c.0.s8 %v1944
        %v1946 = vlaneseq
        %v1947 = vshrl.u32 %v1946, 7
        %v1948 = vsub.s32 %v1945, %v1947
        %v1949 = vrot.slane %v1941, %v1948
        %v1951 = vunpack.c.l.s4 1934713408
        %v1952 = vunpack.c.0.s8 %v1951
        %v1953 = vlaneseq
        %v1954 = vshrl.u32 %v1953, 7
        %v1955 = vsub.s32 %v1952, %v1954
        %v1956 = vrot.slane %v1942, %v1955
        %v1957 = vcombine.high %v1949, 0
        %v1958 = vcombine.high %v1956, 0
        %v1959 = vcombine.low %v1571, %v1575
        %v1961 = vunpack.c.l.s4 1983009808
        %v1962 = vunpack.c.0.s8 %v1961
        %v1963 = vlaneseq
        %v1964 = vshrl.u32 %v1963, 7
        %v1965 = vsub.s32 %v1962, %v1964
        %v1966 = vrot.slane %v1959, %v1965
        %v1967 = vcombine.low %v1573, %v1577
        %v1969 = vunpack.c.l.s4 1983009808
        %v1970 = vunpack.c.0.s8 %v1969
        %v1971 = vlaneseq
        %v1972 = vshrl.u32 %v1971, 7
        %v1973 = vsub.s32 %v1970, %v1972
        %v1974 = vrot.slane %v1967, %v1973
        %v1975 = vcombine.low %v1966, %v1974
        %v1976 = vcombine.high %v1966, %v1974
        %v1978 = vunpack.c.l.s4 1934713408
        %v1979 = vunpack.c.0.s8 %v1978
        %v1980 = vlaneseq
        %v1981 = vshrl.u32 %v1980, 7
        %v1982 = vsub.s32 %v1979, %v1981
        %v1983 = vrot.slane %v1975, %v1982
        %v1985 = vunpack.c.l.s4 1934713408
        %v1986 = vunpack.c.0.s8 %v1985
        %v1987 = vlaneseq
        %v1988 = vshrl.u32 %v1987, 7
        %v1989 = vsub.s32 %v1986, %v1988
        %v1990 = vrot.slane %v1976, %v1989
        %v1991 = vcombine.high %v1983, 0
        %v1992 = vcombine.high %v1990, 0
        %v1993 = vcombine.low %v1603, %v1611
        %v1995 = vunpack.c.l.s4 1983009808
        %v1996 = vunpack.c.0.s8 %v1995
        %v1997 = vlaneseq
        %v1998 = vshrl.u32 %v1997, 7
        %v1999 = vsub.s32 %v1996, %v1998
        %v2000 = vrot.slane %v1993, %v1999
        %v2001 = vcombine.low %v1607, %v1615
        %v2003 = vunpack.c.l.s4 1983009808
        %v2004 = vunpack.c.0.s8 %v2003
        %v2005 = vlaneseq
        %v2006 = vshrl.u32 %v2005, 7
        %v2007 = vsub.s32 %v2004, %v2006
        %v2008 = vrot.slane %v2001, %v2007
        %v2009 = vcombine.low %v2000, %v2008
        %v2010 = vcombine.high %v2000, %v2008
        %v2012 = vunpack.c.l.s4 1934713408
        %v2013 = vunpack.c.0.s8 %v2012
        %v2014 = vlaneseq
        %v2015 = vshrl.u32 %v2014, 7
        %v2016 = vsub.s32 %v2013, %v2015
        %v2017 = vrot.slane %v2009, %v2016
        %v2019 = vunpack.c.l.s4 1934713408
        %v2020 = vunpack.c.0.s8 %v2019
        %v2021 = vlaneseq
        %v2022 = vshrl.u32 %v2021, 7
        %v2023 = vsub.s32 %v2020, %v2022
        %v2024 = vrot.slane %v2010, %v2023
        %v2025 = vcombine.high %v2017, 0
        %v2026 = vcombine.high %v2024, 0
        %v2027 = vcombine.low %v1605, %v1613
        %v2029 = vunpack.c.l.s4 1983009808
        %v2030 = vunpack.c.0.s8 %v2029
        %v2031 = vlaneseq
        %v2032 = vshrl.u32 %v2031, 7
        %v2033 = vsub.s32 %v2030, %v2032
        %v2034 = vrot.slane %v2027, %v2033
        %v2035 = vcombine.low %v1609, %v1617
        %v2037 = vunpack.c.l.s4 1983009808
        %v2038 = vunpack.c.0.s8 %v2037
        %v2039 = vlaneseq
        %v2040 = vshrl.u32 %v2039, 7
        %v2041 = vsub.s32 %v2038, %v2040
        %v2042 = vrot.slane %v2035, %v2041
        %v2043 = vcombine.low %v2034, %v2042
        %v2044 = vcombine.high %v2034, %v2042
        %v2046 = vunpack.c.l.s4 1934713408
        %v2047 = vunpack.c.0.s8 %v2046
        %v2048 = vlaneseq
        %v2049 = vshrl.u32 %v2048, 7
        %v2050 = vsub.s32 %v2047, %v2049
        %v2051 = vrot.slane %v2043, %v2050
        %v2053 = vunpack.c.l.s4 1934713408
        %v2054 = vunpack.c.0.s8 %v2053
        %v2055 = vlaneseq
        %v2056 = vshrl.u32 %v2055, 7
        %v2057 = vsub.s32 %v2054, %v2056
        %v2058 = vrot.slane %v2044, %v2057
        %v2059 = vcombine.high %v2051, 0
        %v2060 = vcombine.high %v2058, 0
        %v2061 = vcombine.low %v1627, %v1635
        %v2063 = vunpack.c.l.s4 1983009808
        %v2064 = vunpack.c.0.s8 %v2063
        %v2065 = vlaneseq
        %v2066 = vshrl.u32 %v2065, 7
        %v2067 = vsub.s32 %v2064, %v2066
        %v2068 = vrot.slane %v2061, %v2067
        %v2069 = vcombine.low %v1631, %v1639
        %v2071 = vunpack.c.l.s4 1983009808
        %v2072 = vunpack.c.0.s8 %v2071
        %v2073 = vlaneseq
        %v2074 = vshrl.u32 %v2073, 7
        %v2075 = vsub.s32 %v2072, %v2074
        %v2076 = vrot.slane %v2069, %v2075
        %v2077 = vcombine.low %v2068, %v2076
        %v2078 = vcombine.high %v2068, %v2076
        %v2080 = vunpack.c.l.s4 1934713408
        %v2081 = vunpack.c.0.s8 %v2080
        %v2082 = vlaneseq
        %v2083 = vshrl.u32 %v2082, 7
        %v2084 = vsub.s32 %v2081, %v2083
        %v2085 = vrot.slane %v2077, %v2084
        %v2087 = vunpack.c.l.s4 1934713408
        %v2088 = vunpack.c.0.s8 %v2087
        %v2089 = vlaneseq
        %v2090 = vshrl.u32 %v2089, 7
        %v2091 = vsub.s32 %v2088, %v2090
        %v2092 = vrot.slane %v2078, %v2091
        %v2093 = vcombine.high %v2085, 0
        %v2094 = vcombine.high %v2092, 0
        %v2095 = vcombine.low %v1629, %v1637
        %v2097 = vunpack.c.l.s4 1983009808
        %v2098 = vunpack.c.0.s8 %v2097
        %v2099 = vlaneseq
        %v2100 = vshrl.u32 %v2099, 7
        %v2101 = vsub.s32 %v2098, %v2100
        %v2102 = vrot.slane %v2095, %v2101
        %v2103 = vcombine.low %v1633, %v1641
        %v2105 = vunpack.c.l.s4 1983009808
        %v2106 = vunpack.c.0.s8 %v2105
        %v2107 = vlaneseq
        %v2108 = vshrl.u32 %v2107, 7
        %v2109 = vsub.s32 %v2106, %v2108
        %v2110 = vrot.slane %v2103, %v2109
        %v2111 = vcombine.low %v2102, %v2110
        %v2112 = vcombine.high %v2102, %v2110
        %v2114 = vunpack.c.l.s4 1934713408
        %v2115 = vunpack.c.0.s8 %v2114
        %v2116 = vlaneseq
        %v2117 = vshrl.u32 %v2116, 7
        %v2118 = vsub.s32 %v2115, %v2117
        %v2119 = vrot.slane %v2111, %v2118
        %v2121 = vunpack.c.l.s4 1934713408
        %v2122 = vunpack.c.0.s8 %v2121
        %v2123 = vlaneseq
        %v2124 = vshrl.u32 %v2123, 7
        %v2125 = vsub.s32 %v2122, %v2124
        %v2126 = vrot.slane %v2112, %v2125
        %v2127 = vcombine.high %v2119, 0
        %v2128 = vcombine.high %v2126, 0
        %v2129 = vcombine.low %v1663, %v1719
        %v2131 = vunpack.c.l.s4 1983009808
        %v2132 = vunpack.c.0.s8 %v2131
        %v2133 = vlaneseq
        %v2134 = vshrl.u32 %v2133, 7
        %v2135 = vsub.s32 %v2132, %v2134
        %v2136 = vrot.slane %v2129, %v2135
        %v2137 = vcombine.low %v1691, %v1747
        %v2139 = vunpack.c.l.s4 1983009808
        %v2140 = vunpack.c.0.s8 %v2139
        %v2141 = vlaneseq
        %v2142 = vshrl.u32 %v2141, 7
        %v2143 = vsub.s32 %v2140, %v2142
        %v2144 = vrot.slane %v2137, %v2143
        %v2145 = vcombine.low %v2136, %v2144
        %v2146 = vcombine.high %v2136, %v2144
        %v2148 = vunpack.c.l.s4 1934713408
        %v2149 = vunpack.c.0.s8 %v2148
        %v2150 = vlaneseq
        %v2151 = vshrl.u32 %v2150, 7
        %v2152 = vsub.s32 %v2149, %v2151
        %v2153 = vrot.slane %v2145, %v2152
        %v2155 = vunpack.c.l.s4 1934713408
        %v2156 = vunpack.c.0.s8 %v2155
        %v2157 = vlaneseq
        %v2158 = vshrl.u32 %v2157, 7
        %v2159 = vsub.s32 %v2156, %v2158
        %v2160 = vrot.slane %v2146, %v2159
        %v2161 = vcombine.high %v2153, 0
        %v2162 = vcombine.high %v2160, 0
        %v2163 = vcombine.low %v1677, %v1733
        %v2165 = vunpack.c.l.s4 1983009808
        %v2166 = vunpack.c.0.s8 %v2165
        %v2167 = vlaneseq
        %v2168 = vshrl.u32 %v2167, 7
        %v2169 = vsub.s32 %v2166, %v2168
        %v2170 = vrot.slane %v2163, %v2169
        %v2171 = vcombine.low %v1705, %v1761
        %v2173 = vunpack.c.l.s4 1983009808
        %v2174 = vunpack.c.0.s8 %v2173
        %v2175 = vlaneseq
        %v2176 = vshrl.u32 %v2175, 7
        %v2177 = vsub.s32 %v2174, %v2176
        %v2178 = vrot.slane %v2171, %v2177
        %v2179 = vcombine.low %v2170, %v2178
        %v2180 = vcombine.high %v2170, %v2178
        %v2182 = vunpack.c.l.s4 1934713408
        %v2183 = vunpack.c.0.s8 %v2182
        %v2184 = vlaneseq
        %v2185 = vshrl.u32 %v2184, 7
        %v2186 = vsub.s32 %v2183, %v2185
        %v2187 = vrot.slane %v2179, %v2186
        %v2189 = vunpack.c.l.s4 1934713408
        %v2190 = vunpack.c.0.s8 %v2189
        %v2191 = vlaneseq
        %v2192 = vshrl.u32 %v2191, 7
        %v2193 = vsub.s32 %v2190, %v2192
        %v2194 = vrot.slane %v2180, %v2193
        %v2195 = vcombine.high %v2187, 0
        %v2196 = vcombine.high %v2194, 0
        %v2197 = vcombine.low %v1771, %v1779
        %v2199 = vunpack.c.l.s4 1983009808
        %v2200 = vunpack.c.0.s8 %v2199
        %v2201 = vlaneseq
        %v2202 = vshrl.u32 %v2201, 7
        %v2203 = vsub.s32 %v2200, %v2202
        %v2204 = vrot.slane %v2197, %v2203
        %v2205 = vcombine.low %v1775, %v1783
        %v2207 = vunpack.c.l.s4 1983009808
        %v2208 = vunpack.c.0.s8 %v2207
        %v2209 = vlaneseq
        %v2210 = vshrl.u32 %v2209, 7
        %v2211 = vsub.s32 %v2208, %v2210
        %v2212 = vrot.slane %v2205, %v2211
        %v2213 = vcombine.low %v2204, %v2212
        %v2214 = vcombine.high %v2204, %v2212
        %v2216 = vunpack.c.l.s4 1934713408
        %v2217 = vunpack.c.0.s8 %v2216
        %v2218 = vlaneseq
        %v2219 = vshrl.u32 %v2218, 7
        %v2220 = vsub.s32 %v2217, %v2219
        %v2221 = vrot.slane %v2213, %v2220
        %v2223 = vunpack.c.l.s4 1934713408
        %v2224 = vunpack.c.0.s8 %v2223
        %v2225 = vlaneseq
        %v2226 = vshrl.u32 %v2225, 7
        %v2227 = vsub.s32 %v2224, %v2226
        %v2228 = vrot.slane %v2214, %v2227
        %v2229 = vcombine.high %v2221, 0
        %v2230 = vcombine.high %v2228, 0
        %v2231 = vcombine.low %v1773, %v1781
        %v2233 = vunpack.c.l.s4 1983009808
        %v2234 = vunpack.c.0.s8 %v2233
        %v2235 = vlaneseq
        %v2236 = vshrl.u32 %v2235, 7
        %v2237 = vsub.s32 %v2234, %v2236
        %v2238 = vrot.slane %v2231, %v2237
        %v2239 = vcombine.low %v1777, %v1785
        %v2241 = vunpack.c.l.s4 1983009808
        %v2242 = vunpack.c.0.s8 %v2241
        %v2243 = vlaneseq
        %v2244 = vshrl.u32 %v2243, 7
        %v2245 = vsub.s32 %v2242, %v2244
        %v2246 = vrot.slane %v2239, %v2245
        %v2247 = vcombine.low %v2238, %v2246
        %v2248 = vcombine.high %v2238, %v2246
        %v2250 = vunpack.c.l.s4 1934713408
        %v2251 = vunpack.c.0.s8 %v2250
        %v2252 = vlaneseq
        %v2253 = vshrl.u32 %v2252, 7
        %v2254 = vsub.s32 %v2251, %v2253
        %v2255 = vrot.slane %v2247, %v2254
        %v2257 = vunpack.c.l.s4 1934713408
        %v2258 = vunpack.c.0.s8 %v2257
        %v2259 = vlaneseq
        %v2260 = vshrl.u32 %v2259, 7
        %v2261 = vsub.s32 %v2258, %v2260
        %v2262 = vrot.slane %v2248, %v2261
        %v2263 = vcombine.high %v2255, 0
        %v2264 = vcombine.high %v2262, 0
        %v2265 = vcombine.low %v1795, %v1803
        %v2267 = vunpack.c.l.s4 1983009808
        %v2268 = vunpack.c.0.s8 %v2267
        %v2269 = vlaneseq
        %v2270 = vshrl.u32 %v2269, 7
        %v2271 = vsub.s32 %v2268, %v2270
        %v2272 = vrot.slane %v2265, %v2271
        %v2273 = vcombine.low %v1799, %v1807
        %v2275 = vunpack.c.l.s4 1983009808
        %v2276 = vunpack.c.0.s8 %v2275
        %v2277 = vlaneseq
        %v2278 = vshrl.u32 %v2277, 7
        %v2279 = vsub.s32 %v2276, %v2278
        %v2280 = vrot.slane %v2273, %v2279
        %v2281 = vcombine.low %v2272, %v2280
        %v2282 = vcombine.high %v2272, %v2280
        %v2284 = vunpack.c.l.s4 1934713408
        %v2285 = vunpack.c.0.s8 %v2284
        %v2286 = vlaneseq
        %v2287 = vshrl.u32 %v2286, 7
        %v2288 = vsub.s32 %v2285, %v2287
        %v2289 = vrot.slane %v2281, %v2288
        %v2291 = vunpack.c.l.s4 1934713408
        %v2292 = vunpack.c.0.s8 %v2291
        %v2293 = vlaneseq
        %v2294 = vshrl.u32 %v2293, 7
        %v2295 = vsub.s32 %v2292, %v2294
        %v2296 = vrot.slane %v2282, %v2295
        %v2297 = vcombine.high %v2289, 0
        %v2298 = vcombine.high %v2296, 0
        %v2299 = vcombine.low %v1797, %v1805
        %v2301 = vunpack.c.l.s4 1983009808
        %v2302 = vunpack.c.0.s8 %v2301
        %v2303 = vlaneseq
        %v2304 = vshrl.u32 %v2303, 7
        %v2305 = vsub.s32 %v2302, %v2304
        %v2306 = vrot.slane %v2299, %v2305
        %v2307 = vcombine.low %v1801, %v1809
        %v2309 = vunpack.c.l.s4 1983009808
        %v2310 = vunpack.c.0.s8 %v2309
        %v2311 = vlaneseq
        %v2312 = vshrl.u32 %v2311, 7
        %v2313 = vsub.s32 %v2310, %v2312
        %v2314 = vrot.slane %v2307, %v2313
        %v2315 = vcombine.low %v2306, %v2314
        %v2316 = vcombine.high %v2306, %v2314
        %v2318 = vunpack.c.l.s4 1934713408
        %v2319 = vunpack.c.0.s8 %v2318
        %v2320 = vlaneseq
        %v2321 = vshrl.u32 %v2320, 7
        %v2322 = vsub.s32 %v2319, %v2321
        %v2323 = vrot.slane %v2315, %v2322
        %v2325 = vunpack.c.l.s4 1934713408
        %v2326 = vunpack.c.0.s8 %v2325
        %v2327 = vlaneseq
        %v2328 = vshrl.u32 %v2327, 7
        %v2329 = vsub.s32 %v2326, %v2328
        %v2330 = vrot.slane %v2316, %v2329
        %v2331 = vcombine.high %v2323, 0
        %v2332 = vcombine.high %v2330, 0
        %v2333 = vcombine.low %v1840, %v1856
        %v2335 = vunpack.c.l.s4 1983009808
        %v2336 = vunpack.c.0.s8 %v2335
        %v2337 = vlaneseq
        %v2338 = vshrl.u32 %v2337, 7
        %v2339 = vsub.s32 %v2336, %v2338
        %v2340 = vrot.slane %v2333, %v2339
        %v2341 = vcombine.low %v1848, %v1864
        %v2343 = vunpack.c.l.s4 1983009808
        %v2344 = vunpack.c.0.s8 %v2343
        %v2345 = vlaneseq
        %v2346 = vshrl.u32 %v2345, 7
        %v2347 = vsub.s32 %v2344, %v2346
        %v2348 = vrot.slane %v2341, %v2347
        %v2349 = vcombine.low %v2340, %v2348
        %v2350 = vcombine.high %v2340, %v2348
        %v2352 = vunpack.c.l.s4 1934713408
        %v2353 = vunpack.c.0.s8 %v2352
        %v2354 = vlaneseq
        %v2355 = vshrl.u32 %v2354, 7
        %v2356 = vsub.s32 %v2353, %v2355
        %v2357 = vrot.slane %v2349, %v2356
        %v2359 = vunpack.c.l.s4 1934713408
        %v2360 = vunpack.c.0.s8 %v2359
        %v2361 = vlaneseq
        %v2362 = vshrl.u32 %v2361, 7
        %v2363 = vsub.s32 %v2360, %v2362
        %v2364 = vrot.slane %v2350, %v2363
        %v2365 = vcombine.high %v2357, 0
        %v2366 = vcombine.high %v2364, 0
        %v2367 = vcombine.low %v1844, %v1860
        %v2369 = vunpack.c.l.s4 1983009808
        %v2370 = vunpack.c.0.s8 %v2369
        %v2371 = vlaneseq
        %v2372 = vshrl.u32 %v2371, 7
        %v2373 = vsub.s32 %v2370, %v2372
        %v2374 = vrot.slane %v2367, %v2373
        %v2375 = vcombine.low %v1852, %v1868
        %v2377 = vunpack.c.l.s4 1983009808
        %v2378 = vunpack.c.0.s8 %v2377
        %v2379 = vlaneseq
        %v2380 = vshrl.u32 %v2379, 7
        %v2381 = vsub.s32 %v2378, %v2380
        %v2382 = vrot.slane %v2375, %v2381
        %v2383 = vcombine.low %v2374, %v2382
        %v2384 = vcombine.high %v2374, %v2382
        %v2386 = vunpack.c.l.s4 1934713408
        %v2387 = vunpack.c.0.s8 %v2386
        %v2388 = vlaneseq
        %v2389 = vshrl.u32 %v2388, 7
        %v2390 = vsub.s32 %v2387, %v2389
        %v2391 = vrot.slane %v2383, %v2390
        %v2393 = vunpack.c.l.s4 1934713408
        %v2394 = vunpack.c.0.s8 %v2393
        %v2395 = vlaneseq
        %v2396 = vshrl.u32 %v2395, 7
        %v2397 = vsub.s32 %v2394, %v2396
        %v2398 = vrot.slane %v2384, %v2397
        %v2399 = vcombine.high %v2391, 0
        %v2400 = vcombine.high %v2398, 0
        %v2401 = vcombine.low %v1878, %v1886
        %v2403 = vunpack.c.l.s4 1983009808
        %v2404 = vunpack.c.0.s8 %v2403
        %v2405 = vlaneseq
        %v2406 = vshrl.u32 %v2405, 7
        %v2407 = vsub.s32 %v2404, %v2406
        %v2408 = vrot.slane %v2401, %v2407
        %v2409 = vcombine.low %v1882, %v1890
        %v2411 = vunpack.c.l.s4 1983009808
        %v2412 = vunpack.c.0.s8 %v2411
        %v2413 = vlaneseq
        %v2414 = vshrl.u32 %v2413, 7
        %v2415 = vsub.s32 %v2412, %v2414
        %v2416 = vrot.slane %v2409, %v2415
        %v2417 = vcombine.low %v2408, %v2416
        %v2418 = vcombine.high %v2408, %v2416
        %v2420 = vunpack.c.l.s4 1934713408
        %v2421 = vunpack.c.0.s8 %v2420
        %v2422 = vlaneseq
        %v2423 = vshrl.u32 %v2422, 7
        %v2424 = vsub.s32 %v2421, %v2423
        %v2425 = vrot.slane %v2417, %v2424
        %v2427 = vunpack.c.l.s4 1934713408
        %v2428 = vunpack.c.0.s8 %v2427
        %v2429 = vlaneseq
        %v2430 = vshrl.u32 %v2429, 7
        %v2431 = vsub.s32 %v2428, %v2430
        %v2432 = vrot.slane %v2418, %v2431
        %v2433 = vcombine.high %v2425, 0
        %v2434 = vcombine.high %v2432, 0
        %v2435 = vcombine.low %v1880, %v1888
        %v2437 = vunpack.c.l.s4 1983009808
        %v2438 = vunpack.c.0.s8 %v2437
        %v2439 = vlaneseq
        %v2440 = vshrl.u32 %v2439, 7
        %v2441 = vsub.s32 %v2438, %v2440
        %v2442 = vrot.slane %v2435, %v2441
        %v2443 = vcombine.low %v1884, %v1892
        %v2445 = vunpack.c.l.s4 1983009808
        %v2446 = vunpack.c.0.s8 %v2445
        %v2447 = vlaneseq
        %v2448 = vshrl.u32 %v2447, 7
        %v2449 = vsub.s32 %v2446, %v2448
        %v2450 = vrot.slane %v2443, %v2449
        %v2451 = vcombine.low %v2442, %v2450
        %v2452 = vcombine.high %v2442, %v2450
        %v2454 = vunpack.c.l.s4 1934713408
        %v2455 = vunpack.c.0.s8 %v2454
        %v2456 = vlaneseq
        %v2457 = vshrl.u32 %v2456, 7
        %v2458 = vsub.s32 %v2455, %v2457
        %v2459 = vrot.slane %v2451, %v2458
        %v2461 = vunpack.c.l.s4 1934713408
        %v2462 = vunpack.c.0.s8 %v2461
        %v2463 = vlaneseq
        %v2464 = vshrl.u32 %v2463, 7
        %v2465 = vsub.s32 %v2462, %v2464
        %v2466 = vrot.slane %v2452, %v2465
        %v2467 = vcombine.high %v2459, 0
        %v2468 = vcombine.high %v2466, 0
        %v2469 = vcombine.low %v1902, %v1910
        %v2471 = vunpack.c.l.s4 1983009808
        %v2472 = vunpack.c.0.s8 %v2471
        %v2473 = vlaneseq
        %v2474 = vshrl.u32 %v2473, 7
        %v2475 = vsub.s32 %v2472, %v2474
        %v2476 = vrot.slane %v2469, %v2475
        %v2477 = vcombine.low %v1906, %v1914
        %v2479 = vunpack.c.l.s4 1983009808
        %v2480 = vunpack.c.0.s8 %v2479
        %v2481 = vlaneseq
        %v2482 = vshrl.u32 %v2481, 7
        %v2483 = vsub.s32 %v2480, %v2482
        %v2484 = vrot.slane %v2477, %v2483
        %v2485 = vcombine.low %v2476, %v2484
        %v2486 = vcombine.high %v2476, %v2484
        %v2488 = vunpack.c.l.s4 1934713408
        %v2489 = vunpack.c.0.s8 %v2488
        %v2490 = vlaneseq
        %v2491 = vshrl.u32 %v2490, 7
        %v2492 = vsub.s32 %v2489, %v2491
        %v2493 = vrot.slane %v2485, %v2492
        %v2495 = vunpack.c.l.s4 1934713408
        %v2496 = vunpack.c.0.s8 %v2495
        %v2497 = vlaneseq
        %v2498 = vshrl.u32 %v2497, 7
        %v2499 = vsub.s32 %v2496, %v2498
        %v2500 = vrot.slane %v2486, %v2499
        %v2501 = vcombine.high %v2493, 0
        %v2502 = vcombine.high %v2500, 0
        %v2503 = vcombine.low %v1904, %v1912
        %v2505 = vunpack.c.l.s4 1983009808
        %v2506 = vunpack.c.0.s8 %v2505
        %v2507 = vlaneseq
        %v2508 = vshrl.u32 %v2507, 7
        %v2509 = vsub.s32 %v2506, %v2508
        %v2510 = vrot.slane %v2503, %v2509
        %v2511 = vcombine.low %v1908, %v1916
        %v2513 = vunpack.c.l.s4 1983009808
        %v2514 = vunpack.c.0.s8 %v2513
        %v2515 = vlaneseq
        %v2516 = vshrl.u32 %v2515, 7
        %v2517 = vsub.s32 %v2514, %v2516
        %v2518 = vrot.slane %v2511, %v2517
        %v2519 = vcombine.low %v2510, %v2518
        %v2520 = vcombine.high %v2510, %v2518
        %v2522 = vunpack.c.l.s4 1934713408
        %v2523 = vunpack.c.0.s8 %v2522
        %v2524 = vlaneseq
        %v2525 = vshrl.u32 %v2524, 7
        %v2526 = vsub.s32 %v2523, %v2525
        %v2527 = vrot.slane %v2519, %v2526
        %v2529 = vunpack.c.l.s4 1934713408
        %v2530 = vunpack.c.0.s8 %v2529
        %v2531 = vlaneseq
        %v2532 = vshrl.u32 %v2531, 7
        %v2533 = vsub.s32 %v2530, %v2532
        %v2534 = vrot.slane %v2520, %v2533
        %v2535 = vcombine.high %v2527, 0
        %v2536 = vcombine.high %v2534, 0
        %v2539 = vpack.i.b16 %v1983, %v1949
        %v2540 = vshrl.u32 %v1949, 16
        %v2541 = vshrl.u32 %v1983, 16
        %v2542 = vpack.i.b16 %v2541, %v2540
        %v2545 = vpack.i.b16 %v1991, %v1957
        %v2546 = vshrl.u32 %v1957, 16
        %v2547 = vshrl.u32 %v1991, 16
        %v2548 = vpack.i.b16 %v2547, %v2546
        %v2551 = vpack.i.b16 %v1990, %v1956
        %v2552 = vshrl.u32 %v1956, 16
        %v2553 = vshrl.u32 %v1990, 16
        %v2554 = vpack.i.b16 %v2553, %v2552
        %v2557 = vpack.i.b16 %v1992, %v1958
        %v2558 = vshrl.u32 %v1958, 16
        %v2559 = vshrl.u32 %v1992, 16
        %v2560 = vpack.i.b16 %v2559, %v2558
        %v2563 = vpack.i.b16 %v2051, %v2017
        %v2564 = vshrl.u32 %v2017, 16
        %v2565 = vshrl.u32 %v2051, 16
        %v2566 = vpack.i.b16 %v2565, %v2564
        %v2569 = vpack.i.b16 %v2059, %v2025
        %v2570 = vshrl.u32 %v2025, 16
        %v2571 = vshrl.u32 %v2059, 16
        %v2572 = vpack.i.b16 %v2571, %v2570
        %v2575 = vpack.i.b16 %v2058, %v2024
        %v2576 = vshrl.u32 %v2024, 16
        %v2577 = vshrl.u32 %v2058, 16
        %v2578 = vpack.i.b16 %v2577, %v2576
        %v2581 = vpack.i.b16 %v2060, %v2026
        %v2582 = vshrl.u32 %v2026, 16
        %v2583 = vshrl.u32 %v2060, 16
        %v2584 = vpack.i.b16 %v2583, %v2582
        %v2587 = vpack.i.b16 %v2119, %v2085
        %v2588 = vshrl.u32 %v2085, 16
        %v2589 = vshrl.u32 %v2119, 16
        %v2590 = vpack.i.b16 %v2589, %v2588
        %v2593 = vpack.i.b16 %v2127, %v2093
        %v2594 = vshrl.u32 %v2093, 16
        %v2595 = vshrl.u32 %v2127, 16
        %v2596 = vpack.i.b16 %v2595, %v2594
        %v2599 = vpack.i.b16 %v2126, %v2092
        %v2600 = vshrl.u32 %v2092, 16
        %v2601 = vshrl.u32 %v2126, 16
        %v2602 = vpack.i.b16 %v2601, %v2600
        %v2605 = vpack.i.b16 %v2128, %v2094
        %v2606 = vshrl.u32 %v2094, 16
        %v2607 = vshrl.u32 %v2128, 16
        %v2608 = vpack.i.b16 %v2607, %v2606
        %v2611 = vpack.i.b16 %v2187, %v2153
        %v2612 = vshrl.u32 %v2153, 16
        %v2613 = vshrl.u32 %v2187, 16
        %v2614 = vpack.i.b16 %v2613, %v2612
        %v2617 = vpack.i.b16 %v2195, %v2161
        %v2618 = vshrl.u32 %v2161, 16
        %v2619 = vshrl.u32 %v2195, 16
        %v2620 = vpack.i.b16 %v2619, %v2618
        %v2623 = vpack.i.b16 %v2194, %v2160
        %v2624 = vshrl.u32 %v2160, 16
        %v2625 = vshrl.u32 %v2194, 16
        %v2626 = vpack.i.b16 %v2625, %v2624
        %v2629 = vpack.i.b16 %v2196, %v2162
        %v2630 = vshrl.u32 %v2162, 16
        %v2631 = vshrl.u32 %v2196, 16
        %v2632 = vpack.i.b16 %v2631, %v2630
        %v2635 = vpack.i.b16 %v2255, %v2221
        %v2636 = vshrl.u32 %v2221, 16
        %v2637 = vshrl.u32 %v2255, 16
        %v2638 = vpack.i.b16 %v2637, %v2636
        %v2641 = vpack.i.b16 %v2263, %v2229
        %v2642 = vshrl.u32 %v2229, 16
        %v2643 = vshrl.u32 %v2263, 16
        %v2644 = vpack.i.b16 %v2643, %v2642
        %v2647 = vpack.i.b16 %v2262, %v2228
        %v2648 = vshrl.u32 %v2228, 16
        %v2649 = vshrl.u32 %v2262, 16
        %v2650 = vpack.i.b16 %v2649, %v2648
        %v2653 = vpack.i.b16 %v2264, %v2230
        %v2654 = vshrl.u32 %v2230, 16
        %v2655 = vshrl.u32 %v2264, 16
        %v2656 = vpack.i.b16 %v2655, %v2654
        %v2659 = vpack.i.b16 %v2323, %v2289
        %v2660 = vshrl.u32 %v2289, 16
        %v2661 = vshrl.u32 %v2323, 16
        %v2662 = vpack.i.b16 %v2661, %v2660
        %v2665 = vpack.i.b16 %v2331, %v2297
        %v2666 = vshrl.u32 %v2297, 16
        %v2667 = vshrl.u32 %v2331, 16
        %v2668 = vpack.i.b16 %v2667, %v2666
        %v2671 = vpack.i.b16 %v2330, %v2296
        %v2672 = vshrl.u32 %v2296, 16
        %v2673 = vshrl.u32 %v2330, 16
        %v2674 = vpack.i.b16 %v2673, %v2672
        %v2677 = vpack.i.b16 %v2332, %v2298
        %v2678 = vshrl.u32 %v2298, 16
        %v2679 = vshrl.u32 %v2332, 16
        %v2680 = vpack.i.b16 %v2679, %v2678
        %v2683 = vpack.i.b16 %v2391, %v2357
        %v2684 = vshrl.u32 %v2357, 16
        %v2685 = vshrl.u32 %v2391, 16
        %v2686 = vpack.i.b16 %v2685, %v2684
        %v2689 = vpack.i.b16 %v2399, %v2365
        %v2690 = vshrl.u32 %v2365, 16
        %v2691 = vshrl.u32 %v2399, 16
        %v2692 = vpack.i.b16 %v2691, %v2690
        %v2695 = vpack.i.b16 %v2398, %v2364
        %v2696 = vshrl.u32 %v2364, 16
        %v2697 = vshrl.u32 %v2398, 16
        %v2698 = vpack.i.b16 %v2697, %v2696
        %v2701 = vpack.i.b16 %v2400, %v2366
        %v2702 = vshrl.u32 %v2366, 16
        %v2703 = vshrl.u32 %v2400, 16
        %v2704 = vpack.i.b16 %v2703, %v2702
        %v2707 = vpack.i.b16 %v2459, %v2425
        %v2708 = vshrl.u32 %v2425, 16
        %v2709 = vshrl.u32 %v2459, 16
        %v2710 = vpack.i.b16 %v2709, %v2708
        %v2713 = vpack.i.b16 %v2467, %v2433
        %v2714 = vshrl.u32 %v2433, 16
        %v2715 = vshrl.u32 %v2467, 16
        %v2716 = vpack.i.b16 %v2715, %v2714
        %v2719 = vpack.i.b16 %v2466, %v2432
        %v2720 = vshrl.u32 %v2432, 16
        %v2721 = vshrl.u32 %v2466, 16
        %v2722 = vpack.i.b16 %v2721, %v2720
        %v2725 = vpack.i.b16 %v2468, %v2434
        %v2726 = vshrl.u32 %v2434, 16
        %v2727 = vshrl.u32 %v2468, 16
        %v2728 = vpack.i.b16 %v2727, %v2726
        %v2731 = vpack.i.b16 %v2527, %v2493
        %v2732 = vshrl.u32 %v2493, 16
        %v2733 = vshrl.u32 %v2527, 16
        %v2734 = vpack.i.b16 %v2733, %v2732
        %v2737 = vpack.i.b16 %v2535, %v2501
        %v2738 = vshrl.u32 %v2501, 16
        %v2739 = vshrl.u32 %v2535, 16
        %v2740 = vpack.i.b16 %v2739, %v2738
        %v2743 = vpack.i.b16 %v2534, %v2500
        %v2744 = vshrl.u32 %v2500, 16
        %v2745 = vshrl.u32 %v2534, 16
        %v2746 = vpack.i.b16 %v2745, %v2744
        %v2749 = vpack.i.b16 %v2536, %v2502
        %v2750 = vshrl.u32 %v2502, 16
        %v2751 = vshrl.u32 %v2536, 16
        %v2752 = vpack.i.b16 %v2751, %v2750
        %v2753 = vunpack.c.l.b16 %v2539
        %v2754 = vunpack.c.l.b16 %v2563
        %v2755 = vunpack.c.l.b16 %v2587
        %v2756 = vunpack.c.l.b16 %v2611
        %v2757 = vunpack.c.l.b16 %v2635
        %v2758 = vunpack.c.l.b16 %v2659
        %v2759 = vunpack.c.l.b16 %v2683
        %v2760 = vunpack.c.l.b16 %v2707
        %v2761 = vunpack.c.l.b16 %v2731
        %v2762 = vpack.c.b16 %v2754, %v2753
        %v2763 = vpack.c.b16 %v2756, %v2755
        %v2764 = vpack.c.b16 %v2758, %v2757
        %v2765 = vpack.c.b16 %v2760, %v2759
        %v2766 = vpack.c.b16 %v2761, %v2761
        %v2767 = vunpack.c.l.b16 %v2542
        %v2768 = vunpack.c.l.b16 %v2566
        %v2769 = vunpack.c.l.b16 %v2590
        %v2770 = vunpack.c.l.b16 %v2614
        %v2771 = vunpack.c.l.b16 %v2638
        %v2772 = vunpack.c.l.b16 %v2662
        %v2773 = vunpack.c.l.b16 %v2686
        %v2774 = vunpack.c.l.b16 %v2710
        %v2775 = vunpack.c.l.b16 %v2734
        %v2776 = vpack.c.b16 %v2768, %v2767
        %v2777 = vpack.c.b16 %v2770, %v2769
        %v2778 = vpack.c.b16 %v2772, %v2771
        %v2779 = vpack.c.b16 %v2774, %v2773
        %v2780 = vpack.c.b16 %v2775, %v2775
        %2781 = vrot.lane.b32.xlu0 %v2776, 8
        %v2782 = vpop.permute.xlu0 %2781
        %2783 = vrot.lane.b32.xlu0 %v2777, 8
        %v2784 = vpop.permute.xlu0 %2783
        %2785 = vrot.lane.b32.xlu0 %v2778, 8
        %v2786 = vpop.permute.xlu0 %2785
        %2787 = vrot.lane.b32.xlu0 %v2779, 8
        %v2788 = vpop.permute.xlu0 %2787
        %2789 = vrot.lane.b32.xlu0 %v2780, 8
        %v2790 = vpop.permute.xlu0 %2789
        %v2791 = vunpack.c.l.b16 %v2545
        %v2792 = vunpack.c.l.b16 %v2569
        %v2793 = vunpack.c.l.b16 %v2593
        %v2794 = vunpack.c.l.b16 %v2617
        %v2795 = vunpack.c.l.b16 %v2641
        %v2796 = vunpack.c.l.b16 %v2665
        %v2797 = vunpack.c.l.b16 %v2689
        %v2798 = vunpack.c.l.b16 %v2713
        %v2799 = vunpack.c.l.b16 %v2737
        %v2800 = vpack.c.b16 %v2792, %v2791
        %v2801 = vpack.c.b16 %v2794, %v2793
        %v2802 = vpack.c.b16 %v2796, %v2795
        %v2803 = vpack.c.b16 %v2798, %v2797
        %v2804 = vpack.c.b16 %v2799, %v2799
        %2805 = vrot.lane.b32.xlu0 %v2800, 16
        %v2806 = vpop.permute.xlu0 %2805
        %2807 = vrot.lane.b32.xlu0 %v2801, 16
        %v2808 = vpop.permute.xlu0 %2807
        %2809 = vrot.lane.b32.xlu0 %v2802, 16
        %v2810 = vpop.permute.xlu0 %2809
        %2811 = vrot.lane.b32.xlu0 %v2803, 16
        %v2812 = vpop.permute.xlu0 %2811
        %2813 = vrot.lane.b32.xlu0 %v2804, 16
        %v2814 = vpop.permute.xlu0 %2813
        %v2815 = vunpack.c.l.b16 %v2548
        %v2816 = vunpack.c.l.b16 %v2572
        %v2817 = vunpack.c.l.b16 %v2596
        %v2818 = vunpack.c.l.b16 %v2620
        %v2819 = vunpack.c.l.b16 %v2644
        %v2820 = vunpack.c.l.b16 %v2668
        %v2821 = vunpack.c.l.b16 %v2692
        %v2822 = vunpack.c.l.b16 %v2716
        %v2823 = vunpack.c.l.b16 %v2740
        %v2824 = vpack.c.b16 %v2816, %v2815
        %v2825 = vpack.c.b16 %v2818, %v2817
        %v2826 = vpack.c.b16 %v2820, %v2819
        %v2827 = vpack.c.b16 %v2822, %v2821
        %v2828 = vpack.c.b16 %v2823, %v2823
        %2829 = vrot.lane.b32.xlu0 %v2824, 24
        %v2830 = vpop.permute.xlu0 %2829
        %2831 = vrot.lane.b32.xlu0 %v2825, 24
        %v2832 = vpop.permute.xlu0 %2831
        %2833 = vrot.lane.b32.xlu0 %v2826, 24
        %v2834 = vpop.permute.xlu0 %2833
        %2835 = vrot.lane.b32.xlu0 %v2827, 24
        %v2836 = vpop.permute.xlu0 %2835
        %2837 = vrot.lane.b32.xlu0 %v2828, 24
        %v2838 = vpop.permute.xlu0 %2837
        %v2839 = vunpack.c.l.b16 %v2551
        %v2840 = vunpack.c.l.b16 %v2575
        %v2841 = vunpack.c.l.b16 %v2599
        %v2842 = vunpack.c.l.b16 %v2623
        %v2843 = vunpack.c.l.b16 %v2647
        %v2844 = vunpack.c.l.b16 %v2671
        %v2845 = vunpack.c.l.b16 %v2695
        %v2846 = vunpack.c.l.b16 %v2719
        %v2847 = vunpack.c.l.b16 %v2743
        %v2848 = vpack.c.b16 %v2840, %v2839
        %v2849 = vpack.c.b16 %v2842, %v2841
        %v2850 = vpack.c.b16 %v2844, %v2843
        %v2851 = vpack.c.b16 %v2846, %v2845
        %v2852 = vpack.c.b16 %v2847, %v2847
        %2853 = vrot.lane.b32.xlu0 %v2848, 32
        %v2854 = vpop.permute.xlu0 %2853
        %2855 = vrot.lane.b32.xlu0 %v2849, 32
        %v2856 = vpop.permute.xlu0 %2855
        %2857 = vrot.lane.b32.xlu0 %v2850, 32
        %v2858 = vpop.permute.xlu0 %2857
        %2859 = vrot.lane.b32.xlu0 %v2851, 32
        %v2860 = vpop.permute.xlu0 %2859
        %2861 = vrot.lane.b32.xlu0 %v2852, 32
        %v2862 = vpop.permute.xlu0 %2861
        %v2863 = vunpack.c.l.b16 %v2554
        %v2864 = vunpack.c.l.b16 %v2578
        %v2865 = vunpack.c.l.b16 %v2602
        %v2866 = vunpack.c.l.b16 %v2626
        %v2867 = vunpack.c.l.b16 %v2650
        %v2868 = vunpack.c.l.b16 %v2674
        %v2869 = vunpack.c.l.b16 %v2698
        %v2870 = vunpack.c.l.b16 %v2722
        %v2871 = vunpack.c.l.b16 %v2746
        %v2872 = vpack.c.b16 %v2864, %v2863
        %v2873 = vpack.c.b16 %v2866, %v2865
        %v2874 = vpack.c.b16 %v2868, %v2867
        %v2875 = vpack.c.b16 %v2870, %v2869
        %v2876 = vpack.c.b16 %v2871, %v2871
        %2877 = vrot.lane.b32.xlu0 %v2872, 40
        %v2878 = vpop.permute.xlu0 %2877
        %2879 = vrot.lane.b32.xlu0 %v2873, 40
        %v2880 = vpop.permute.xlu0 %2879
        %2881 = vrot.lane.b32.xlu0 %v2874, 40
        %v2882 = vpop.permute.xlu0 %2881
        %2883 = vrot.lane.b32.xlu0 %v2875, 40
        %v2884 = vpop.permute.xlu0 %2883
        %2885 = vrot.lane.b32.xlu0 %v2876, 40
        %v2886 = vpop.permute.xlu0 %2885
        %v2887 = vunpack.c.l.b16 %v2557
        %v2888 = vunpack.c.l.b16 %v2581
        %v2889 = vunpack.c.l.b16 %v2605
        %v2890 = vunpack.c.l.b16 %v2629
        %v2891 = vunpack.c.l.b16 %v2653
        %v2892 = vunpack.c.l.b16 %v2677
        %v2893 = vunpack.c.l.b16 %v2701
        %v2894 = vunpack.c.l.b16 %v2725
        %v2895 = vunpack.c.l.b16 %v2749
        %v2896 = vpack.c.b16 %v2888, %v2887
        %v2897 = vpack.c.b16 %v2890, %v2889
        %v2898 = vpack.c.b16 %v2892, %v2891
        %v2899 = vpack.c.b16 %v2894, %v2893
        %v2900 = vpack.c.b16 %v2895, %v2895
        %2901 = vrot.lane.b32.xlu0 %v2896, 48
        %v2902 = vpop.permute.xlu0 %2901
        %2903 = vrot.lane.b32.xlu0 %v2897, 48
        %v2904 = vpop.permute.xlu0 %2903
        %2905 = vrot.lane.b32.xlu0 %v2898, 48
        %v2906 = vpop.permute.xlu0 %2905
        %2907 = vrot.lane.b32.xlu0 %v2899, 48
        %v2908 = vpop.permute.xlu0 %2907
        %2909 = vrot.lane.b32.xlu0 %v2900, 48
        %v2910 = vpop.permute.xlu0 %2909
        %v2911 = vunpack.c.l.b16 %v2560
        %v2912 = vunpack.c.l.b16 %v2584
        %v2913 = vunpack.c.l.b16 %v2608
        %v2914 = vunpack.c.l.b16 %v2632
        %v2915 = vunpack.c.l.b16 %v2656
        %v2916 = vunpack.c.l.b16 %v2680
        %v2917 = vunpack.c.l.b16 %v2704
        %v2918 = vunpack.c.l.b16 %v2728
        %v2919 = vunpack.c.l.b16 %v2752
        %v2920 = vpack.c.b16 %v2912, %v2911
        %v2921 = vpack.c.b16 %v2914, %v2913
        %v2922 = vpack.c.b16 %v2916, %v2915
        %v2923 = vpack.c.b16 %v2918, %v2917
        %v2924 = vpack.c.b16 %v2919, %v2919
        %2925 = vrot.lane.b32.xlu0 %v2920, 56
        %v2926 = vpop.permute.xlu0 %2925
        %2927 = vrot.lane.b32.xlu0 %v2921, 56
        %v2928 = vpop.permute.xlu0 %2927
        %2929 = vrot.lane.b32.xlu0 %v2922, 56
        %v2930 = vpop.permute.xlu0 %2929
        %2931 = vrot.lane.b32.xlu0 %v2923, 56
        %v2932 = vpop.permute.xlu0 %2931
        %2933 = vrot.lane.b32.xlu0 %v2924, 56
        %v2934 = vpop.permute.xlu0 %2933
        %v2937 = vsel %vm1008, %v2762, %v2782
        %v2940 = vsel %vm1008, %v2763, %v2784
        %v2943 = vsel %vm1008, %v2764, %v2786
        %v2946 = vsel %vm1008, %v2765, %v2788
        %v2949 = vsel %vm1008, %v2766, %v2790
        %v2951 = vsel %vm1018, %v2937, %v2806
        %v2953 = vsel %vm1018, %v2940, %v2808
        %v2955 = vsel %vm1018, %v2943, %v2810
        %v2957 = vsel %vm1018, %v2946, %v2812
        %v2959 = vsel %vm1018, %v2949, %v2814
        %v2961 = vsel %vm1025, %v2951, %v2830
        %v2963 = vsel %vm1025, %v2953, %v2832
        %v2965 = vsel %vm1025, %v2955, %v2834
        %v2967 = vsel %vm1025, %v2957, %v2836
        %v2969 = vsel %vm1025, %v2959, %v2838
        %v2971 = vsel %vm1032, %v2961, %v2854
        %v2973 = vsel %vm1032, %v2963, %v2856
        %v2975 = vsel %vm1032, %v2965, %v2858
        %v2977 = vsel %vm1032, %v2967, %v2860
        %v2979 = vsel %vm1032, %v2969, %v2862
        %v2981 = vsel %vm1039, %v2971, %v2878
        %v2983 = vsel %vm1039, %v2973, %v2880
        %v2985 = vsel %vm1039, %v2975, %v2882
        %v2987 = vsel %vm1039, %v2977, %v2884
        %v2989 = vsel %vm1039, %v2979, %v2886
        %v2991 = vsel %vm1046, %v2981, %v2902
        %v2993 = vsel %vm1046, %v2983, %v2904
        %v2995 = vsel %vm1046, %v2985, %v2906
        %v2997 = vsel %vm1046, %v2987, %v2908
        %v2999 = vsel %vm1046, %v2989, %v2910
        %v3001 = vsel %vm1053, %v2991, %v2926
        %v3004 = vsel %vm1053, %v2993, %v2928
        %v3007 = vsel %vm1053, %v2995, %v2930
        %v3010 = vsel %vm1053, %v2997, %v2932
        %v3013 = vsel %vm1053, %v2999, %v2934
        %v3014 = vld [vmem:[%s3] sm:$0xf]
        %v3015 = vld [vmem:[%s4] sm:$0xff]
        %3017 = vset.pattern.permute.xlu0 0
        %3018 = vperm.xlu0 %3017, %v3015
        %v3019 = vpop.permute.xlu0 %3018
        %vm3021 = vcmask 588800
        %v3023 = vsel %vm3021, %v3014, 0
        %vm3025 = vcmask 1043456
        %v3026 = vsel %vm3025, %v3013, 0
        %3028 = vmatprep.subr.bf16.mxu0 0
        %3029 = vmatpush1.bf16.msra.mxu0 0
        %3030 = vmatprep.subr.bf16.mxu0 0
        %3031 = vmatpush1.bf16.msra.mxu0 0
        %3032 = vmatprep.subr.bf16.mxu0 0
        %3033 = vmatpush1.bf16.msra.mxu0 0
        %3034 = vmatprep.subr.bf16.mxu0 0
        %3035 = vmatpush1.bf16.msra.mxu0 %v3026
        %3036 = vmatprep.subr.bf16.mxu0 0
        %3037 = vmatpush1.bf16.msra.mxu0 %v3010
        %3038 = vmatprep.subr.bf16.mxu0 0
        %3039 = vmatpush1.bf16.msra.mxu0 %v3007
        %3040 = vmatprep.subr.bf16.mxu0 0
        %3041 = vmatpush1.bf16.msra.mxu0 %v3004
        %3042 = vmatprep.subr.bf16.mxu0 0
        %3043 = vmatpush1.bf16.msra.mxu0 %v3001
        %3044 = vmatprep.subr.bf16.mxu0 0
        %3045 = vmatpush2.bf16.msra.mxu0 0
        %3046 = vmatprep.subr.bf16.mxu0 0
        %3047 = vmatpush2.bf16.msra.mxu0 0
        %3048 = vmatprep.subr.bf16.mxu0 0
        %3049 = vmatpush2.bf16.msra.mxu0 0
        %3050 = vmatprep.subr.bf16.mxu0 0
        %3051 = vmatpush2.bf16.msra.mxu0 0
        %3052 = vmatprep.subr.bf16.mxu0 0
        %3053 = vmatpush2.bf16.msra.mxu0 0
        %3054 = vmatprep.subr.bf16.mxu0 0
        %3055 = vmatpush2.bf16.msra.mxu0 0
        %3056 = vmatprep.subr.bf16.mxu0 0
        %3057 = vmatpush2.bf16.msra.mxu0 0
        %3058 = vmatprep.subr.bf16.mxu0 0
        %3059 = vmatpush2.bf16.msra.mxu0 0
        %3060 = vmatprep.mubr.bf16.mxu0 0
        %3061 = vmatmul.mubr.bf16.gmra.mxu0 %v3023
        %v3062 = vpop.f32.mrf.mxu0
        %v3063 = vadd.f32 %v3019, %v3062
        %v3064 = vpop.f32.mrf.mxu0
        %v3065 = vpop.f32.mrf.mxu0
        %v3066 = vpop.f32.mrf.mxu0
        %3067 = vdwg.mxu0
        %v3068 = vmul.f32 %v3063, 0.2
        %v3069 = vmax.f32 %v3063, %v3068
        %vm3070 = vcmask 523264
        %3071 = vst.msk [vmem:[%s217] sm:$0xff] %vm3070, %v3069
        %s3072 = sand.u32 %s137, 1
        %s3073 = scalar_lea.sflag [#allocation4], %s3072
        %s3074 = sand.u32 %s137, 1
        %s3075 = smul.addr %s3074, 8
        %s3076 = scalar_lea.vmem [#allocation3], %s3075
        // Predicated region
        $region41: #{tpu_custom_call.1} parent=39 // pred_check
          %p3077 = pneg %p147
        $region42: #{tpu_custom_call.1} parent=39 // pred_check_branch
          %3079 = sbr.rel (%p3077) target = $region44
        $region43: #{tpu_custom_call.1} parent=39 // pred_region
          %s3081 = ssub.s32 128, 128
          %3082 = vsyncadd %s3073, %s3081
          %s3083 = smul.addr %s19, 128
          %s3084 = scalar_lea.hbm %s5, %s3083
          %s3086 = sshll.u32 %s3076, 4
          %s3087 = int_to_ptr.vmem [resolvable:$true] %s3086
          %3089 = dma.vmem_to_hbm [thread:$0]  %s3087, 128, %s3084, %s3073
        $region44: #{tpu_custom_call.1} parent=39 // pred_fallthru
          _
      $region40: #{tpu_custom_call.1} parent=5 // pred_fallthru
        _
      %p3090 = scmp.le.s32.totalorder 2, %s14
      // Predicated region
      $region45: #{tpu_custom_call.1} parent=5 // pred_check
        %p3091 = pneg %p3090
      $region46: #{tpu_custom_call.1} parent=5 // pred_check_branch
        %3093 = sbr.rel (%p3091) target = $region48
      $region47: #{tpu_custom_call.1} parent=5 // pred_region
        %s3094 = ssub.s32 %s14, 2
        // Predicated region
        $region49: #{tpu_custom_call.1} parent=47 // pred_check
          %p3095 = pneg %p153
        $region50: #{tpu_custom_call.1} parent=47 // pred_check_branch
          %3097 = sbr.rel (%p3095) target = $region52
        $region51: #{tpu_custom_call.1} parent=47 // pred_region
          %s3098 = sand.u32 %s138, 1
          %s3099 = scalar_lea.sflag [#allocation4], %s3098
          %s3100 = sand.u32 %s138, 1
          %s3101 = smul.addr %s3100, 8
          %s3102 = scalar_lea.vmem [#allocation3], %s3101
          %3103 = dma.done %s3099, 128
        $region52: #{tpu_custom_call.1} parent=47 // pred_fallthru
          _
      $region48: #{tpu_custom_call.1} parent=5 // pred_fallthru
        _
    $region6: #{tpu_custom_call.1} parent=1 // loop_footer
      %s18 = sadd.s32 1, %s14
    $region7: #{tpu_custom_call.1} parent=1 // loop_footer_branch
      %13 = sbr.rel target = $region3
    $region8: #{tpu_custom_call.1} parent=1 // loop_exit
      _
    %3104 = vsyncpa [#allocation4], 1
    %s3105 = scalar_lea.sflag [#allocation4], 1
    %3106 = vsyncpa %s3105, 1

</llo_original>
